<compile_context>
chip_gen: v5e
topology: v5e:2x2
jax: 0.10.0
libtpu: 0.0.40
codegen_flags: <defaults>
</compile_context>

<pallas_src>
import numpy as np
import jax
import jax.numpy as jnp
from jax import lax
from jax.experimental import pallas as pl
from jax.experimental.pallas import tpu as pltpu


def _round_up(x, m):
    return (x + m - 1) // m * m


# ----------------------------- Pallas kernel ------------------------------ #
def gru_kernel(h0_ref, len_ref, whh_ref, bhh_ref, gates_ref, out_ref, hN_ref):
    """One grid step == TILE_T GRU time steps for one batch shard.

    h0_ref:    (TILE_B, Dp)            initial hidden (padded)
    len_ref:   (TILE_B, 1) int32       sequence lengths
    whh_ref:   (Dp, 3*Dp)              fused hidden->gate weights [r|z|n]
    bhh_ref:   (1, 3*Dp)               fused hidden biases
    gates_ref: (TILE_T, TILE_B, 3*Dp)  precomputed x @ Wih + bih (hoisted)
    out_ref:   (TILE_T, TILE_B, Dp)    GRU outputs (zeroed past length)
    hN_ref:    (TILE_B, Dp)            final hidden; ALSO the state carry
                                       (resident output across the time axis)
    """
    tb = pl.program_id(1)              # time-block index (innermost grid axis)
    tile_t = gates_ref.shape[0]
    Dp = hN_ref.shape[-1]

    @pl.when(tb == 0)
    def _():
        hN_ref[...] = h0_ref[...]

    whh = whh_ref[...]                 # resident weights, constant index map
    bhh = bhh_ref[...]
    lens = len_ref[...]                # (TILE_B, 1) int32
    t0 = tb * tile_t

    def step(lt, carry):
        h = hN_ref[...]                                  # (TILE_B, Dp) f32
        gi = gates_ref[lt]                               # (TILE_B, 3*Dp)
        gh = jnp.dot(h, whh, preferred_element_type=jnp.float32) + bhh
        r = jax.nn.sigmoid(gi[:, 0:Dp] + gh[:, 0:Dp])
        z = jax.nn.sigmoid(gi[:, Dp:2 * Dp] + gh[:, Dp:2 * Dp])
        n = jnp.tanh(gi[:, 2 * Dp:3 * Dp] + r * gh[:, 2 * Dp:3 * Dp])
        h_new = (1.0 - z) * n + z * h
        m = (lens > (t0 + lt)).astype(jnp.float32)       # (TILE_B, 1) mask
        out_ref[lt] = m * h_new                          # pad positions -> 0
        hN_ref[...] = m * h_new + (1.0 - m) * h          # carry state past len
        return carry

    lax.fori_loop(0, tile_t, step, 0, unroll=True)


def gru_forward_pallas(x, h0, wih, whh, bih, bhh, lengths, *, tile_t=16,
                       tile_b=None):
    """x: (T, B, D) f32; h0: (B, D); wih/whh: (3, D, D) pre-transposed so
    x @ w[g]; bih/bhh: (3, 1, D); lengths: (B,) int32.
    Returns (output (T, B, D), hidden (B, D))."""
    T, B, D = x.shape
    Dp = _round_up(D, 128)             # lane-dense gate/output width
    Bp = _round_up(B, 8)               # f32 sublane multiple
    G = 3 * Dp

    TILE_T = min(tile_t, T)
    Tp = _round_up(T, TILE_T)
    TILE_B = Bp if tile_b is None else tile_b   # split for v7x 2-core w/ big B

    def fuse_pad_w(w):                 # (3, D, D) -> (Dp, 3*Dp), zero padded
        Wp = jnp.zeros((Dp, G), jnp.float32)
        for g in range(3):
            Wp = Wp.at[:D, g * Dp:g * Dp + D].set(w[g])
        return Wp

    def fuse_pad_b(b):                 # (3, 1, D) -> (1, 3*Dp)
        bp = jnp.zeros((1, G), jnp.float32)
        for g in range(3):
            bp = bp.at[0, g * Dp:g * Dp + D].set(b[g].reshape(D))
        return bp

    wih_f, whh_f = fuse_pad_w(wih), fuse_pad_w(whh)
    bih_f, bhh_f = fuse_pad_b(bih), fuse_pad_b(bhh)

    # Hoisted input projection: one large parallel matmul over all timesteps,
    # bih folded in.  Zero padding keeps padded hidden columns exactly 0.
    x_pad = jnp.zeros((Tp, Bp, Dp), jnp.float32).at[:T, :B, :D].set(x)
    gates_in = jnp.einsum('tbd,dg->tbg', x_pad, wih_f) + bih_f   # (Tp, Bp, G)

    h0_pad = jnp.zeros((Bp, Dp), jnp.float32).at[:B, :D].set(h0)
    len_pad = jnp.zeros((Bp, 1), jnp.int32).at[:B, 0].set(
        lengths.astype(jnp.int32))

    grid = (Bp // TILE_B, Tp // TILE_T)

    # TODO(synk): for very large D on v7x (64 MiB VMEM), single-buffer the
    # resident whh tile (pl.Buffered(1)) or tile the fused gate dim.
    out_pad, hN_pad = pl.pallas_call(
        gru_kernel,
        out_shape=(
            jax.ShapeDtypeStruct((Tp, Bp, Dp), jnp.float32),
            jax.ShapeDtypeStruct((Bp, Dp), jnp.float32),
        ),
        grid_spec=pltpu.PrefetchScalarGridSpec(
            num_scalar_prefetch=0,
            grid=grid,
            in_specs=[
                pl.BlockSpec((TILE_B, Dp), lambda b, t: (b, 0)),        # h0
                pl.BlockSpec((TILE_B, 1), lambda b, t: (b, 0)),         # lens
                pl.BlockSpec((Dp, G), lambda b, t: (0, 0)),             # whh
                pl.BlockSpec((1, G), lambda b, t: (0, 0)),              # bhh
                pl.BlockSpec((TILE_T, TILE_B, G), lambda b, t: (t, b, 0)),
            ],
            out_specs=[
                pl.BlockSpec((TILE_T, TILE_B, Dp), lambda b, t: (t, b, 0)),
                pl.BlockSpec((TILE_B, Dp), lambda b, t: (b, 0)),
            ],
        ),
        compiler_params=pltpu.CompilerParams(
            dimension_semantics=("parallel", "arbitrary")),
    )(h0_pad, len_pad, whh_f, bhh_f, gates_in)

    return out_pad[:T, :B, :D], hN_pad[:B, :D]


# ------------------------------ glue / model ------------------------------ #
def init_params(n_embeddings, input_dim, seed=0):
    D = input_dim
    key = jax.random.PRNGKey(seed)
    k1, k2, k3, k4, k5 = jax.random.split(key, 5)
    bound = 1.0 / np.sqrt(D)
    return {
        # nn.Embedding default init: N(0, 1); row n_embeddings = "start" token
        "embedding": jax.random.normal(k1, (n_embeddings + 1, D), jnp.float32),
        # GRU weights, gate order [r, z, n]; pre-transposed so x @ W works
        "wih": jax.random.uniform(k2, (3, D, D), jnp.float32, -bound, bound),
        "whh": jax.random.uniform(k3, (3, D, D), jnp.float32, -bound, bound),
        "bih": jax.random.uniform(k4, (3, 1, D), jnp.float32, -bound, bound),
        "bhh": jax.random.uniform(k5, (3, 1, D), jnp.float32, -bound, bound),
    }


def super_awesome_forward(params, events, input_lengths):
    """events: (T, B) int32; input_lengths: (B,) int32 (sorted descending,
    max(input_lengths) == T).  Returns (output (T, B, D), hidden (1, B, D))."""
    emb = params["embedding"]
    n_embeddings = emb.shape[0] - 1
    D = emb.shape[1]
    T, B = events.shape

    # Embedding max_norm=1: rows with L2 norm > 1 renormalized on lookup.
    norms = jnp.linalg.norm(emb, axis=-1, keepdims=True)
    emb_c = emb * jnp.minimum(1.0, 1.0 / jnp.maximum(norms, 1e-12))

    h0 = jnp.broadcast_to(emb_c[n_embeddings], (B, D)).astype(jnp.float32)
    x = emb_c[events].astype(jnp.float32)                        # (T, B, D)

    out, hN = gru_forward_pallas(x, h0, params["wih"], params["whh"],
                                 params["bih"], params["bhh"], input_lengths)
    # TODO(synk): pad_packed_sequence truncates to max(input_lengths); here
    # max(input_lengths) == T so no extra truncation is needed.
    return out, hN[None, ...]


def gru_reference(x, h0, wih, whh, bih, bhh, mask):
    """Pure-JAX reference (lax.scan) for correctness checking."""
    def step(h, inp):
        xt, mt = inp
        i_r = xt @ wih[0] + bih[0]
        i_z = xt @ wih[1] + bih[1]
        i_n = xt @ wih[2] + bih[2]
        h_r = h @ whh[0] + bhh[0]
        h_z = h @ whh[1] + bhh[1]
        h_n = h @ whh[2] + bhh[2]
        r = jax.nn.sigmoid(i_r + h_r)
        z = jax.nn.sigmoid(i_z + h_z)
        n = jnp.tanh(i_n + r * h_n)
        h_new = (1.0 - z) * n + z * h
        h_next = mt * h_new + (1.0 - mt) * h
        return h_next, mt * h_new
    hN, out = lax.scan(step, h0, (x, mask))
    return out, hN


if __name__ == "__main__":
    T, B, D, N_EMB = 8, 4, 32, 16
    params = init_params(N_EMB, D, seed=0)

    key = jax.random.PRNGKey(0)
    events = jax.random.randint(key, (T, B), 0, N_EMB, dtype=jnp.int32)
    input_lengths = jnp.array([8, 6, 5, 3], dtype=jnp.int32)  # sorted desc

    fwd = jax.jit(super_awesome_forward)
    output, hidden = jax.block_until_ready(fwd(params, events, input_lengths))

    # Cross-check the Pallas GRU against the pure-JAX reference.
    emb = params["embedding"]
    norms = jnp.linalg.norm(emb, axis=-1, keepdims=True)
    emb_c = emb * jnp.minimum(1.0, 1.0 / jnp.maximum(norms, 1e-12))
    x_ref = emb_c[events].astype(jnp.float32)
    h0_ref = jnp.broadcast_to(emb_c[N_EMB], (B, D)).astype(jnp.float32)
    mask_ref = (jnp.arange(T)[:, None] < input_lengths[None, :]
                ).astype(jnp.float32)[:, :, None]
    out_ref, hN_ref = gru_reference(x_ref, h0_ref, params["wih"], params["whh"],
                                    params["bih"], params["bhh"], mask_ref)

    np.testing.assert_allclose(np.asarray(output), np.asarray(out_ref),
                               rtol=1e-5, atol=1e-5)
    np.testing.assert_allclose(np.asarray(hidden[0]), np.asarray(hN_ref),
                               rtol=1e-5, atol=1e-5)
    assert output.shape == (T, B, D) and hidden.shape == (1, B, D)
    print("KERNEL_OK")
</pallas_src>

<mosaic_0001>
module attributes {stable_mosaic.version = 11 : i64} {
  func.func @gru_kernel(%arg0: i32, %arg1: i32, %arg2: memref<8x128xf32, #tpu.memory_space<vmem>>, %arg3: memref<8x1xi32, #tpu.memory_space<vmem>>, %arg4: memref<128x384xf32, #tpu.memory_space<vmem>>, %arg5: memref<1x384xf32, #tpu.memory_space<vmem>>, %arg6: memref<8x8x384xf32, #tpu.memory_space<vmem>>, %arg7: memref<8x8x128xf32, #tpu.memory_space<vmem>>, %arg8: memref<8x128xf32, #tpu.memory_space<vmem>>) attributes {dimension_semantics = [#tpu.dimension_semantics<parallel>, #tpu.dimension_semantics<arbitrary>], iteration_bounds = array<i64: 1, 1>, scalar_prefetch = 0 : i64, scratch_operands = 0 : i64, tpu.core_type = #tpu.core_type<tc>, window_params = [{transform_indices = @transform_0, window_bounds = array<i64: 8, 128>}, {transform_indices = @transform_1, window_bounds = array<i64: 8, 1>}, {pipeline_mode = #tpu.pipeline_mode<synchronous>, transform_indices = @transform_2, window_bounds = array<i64: 128, 384>}, {pipeline_mode = #tpu.pipeline_mode<synchronous>, transform_indices = @transform_3, window_bounds = array<i64: 1, 384>}, {transform_indices = @transform_4, window_bounds = array<i64: 8, 8, 384>}, {transform_indices = @transform_5, window_bounds = array<i64: 8, 8, 128>}, {transform_indices = @transform_6, window_bounds = array<i64: 8, 128>}]} {
    %c0_i32 = arith.constant 0 : i32
    %0 = arith.cmpi eq, %arg1, %c0_i32 : i32
    %1 = arith.extui %0 : i1 to i32
    %c0_i32_0 = arith.constant 0 : i32
    %2 = arith.cmpi ne, %1, %c0_i32_0 : i32
    scf.if %2 {
      %c0_111 = arith.constant 0 : index
      %c0_112 = arith.constant 0 : index
      %423 = vector.load %arg2[%c0_111, %c0_112] : memref<8x128xf32, #tpu.memory_space<vmem>>, vector<8x128xf32>
      %c0_113 = arith.constant 0 : index
      %c0_114 = arith.constant 0 : index
      %424 = vector.load %arg8[%c0_113, %c0_114] : memref<8x128xf32, #tpu.memory_space<vmem>>, vector<8x128xf32>
      tpu.vector_store %arg8[%c0_113, %c0_114], %423 {strides = array<i32>} : memref<8x128xf32, #tpu.memory_space<vmem>>, vector<8x128xf32>,
    } else {
    }
    %c0 = arith.constant 0 : index
    %c0_1 = arith.constant 0 : index
    %3 = vector.load %arg4[%c0, %c0_1] : memref<128x384xf32, #tpu.memory_space<vmem>>, vector<128x384xf32>
    %c0_2 = arith.constant 0 : index
    %c0_3 = arith.constant 0 : index
    %4 = vector.load %arg5[%c0_2, %c0_3] : memref<1x384xf32, #tpu.memory_space<vmem>>, vector<1x384xf32>
    %c0_4 = arith.constant 0 : index
    %c0_5 = arith.constant 0 : index
    %5 = vector.load %arg3[%c0_4, %c0_5] : memref<8x1xi32, #tpu.memory_space<vmem>>, vector<8x1xi32>
    %c8_i32 = arith.constant 8 : i32
    %6 = arith.muli %arg1, %c8_i32 : i32
    %c0_i32_6 = arith.constant 0 : i32
    %c0_7 = arith.constant 0 : index
    %c0_8 = arith.constant 0 : index
    %7 = vector.load %arg8[%c0_7, %c0_8] : memref<8x128xf32, #tpu.memory_space<vmem>>, vector<8x128xf32>
    %8 = arith.index_cast %c0_i32_6 : i32 to index
    %c0_9 = arith.constant 0 : index
    %c0_10 = arith.constant 0 : index
    %9 = vector.load %arg6[%8, %c0_9, %c0_10] : memref<8x8x384xf32, #tpu.memory_space<vmem>>, vector<1x8x384xf32>
    %10 = vector.shape_cast %9 : vector<1x8x384xf32> to vector<8x384xf32>
    %cst = arith.constant dense<0.000000e+00> : vector<8x384xf32>
    %11 = tpu.matmul %7, %3, %cst {dimension_numbers = #tpu.dot_dimension_numbers<[1], [0], [0], [1], [0, 0, 1, 1], [], []>} : vector<8x128xf32>, vector<128x384xf32>, vector<8x384xf32> -> vector<8x384xf32>
    %12 = vector.broadcast %4 : vector<1x384xf32> to vector<8x384xf32>
    %13 = arith.addf %11, %12 : vector<8x384xf32>
    %14 = vector.extract_strided_slice %10 {offsets = [0, 0], sizes = [8, 128], strides = [1, 1]} : vector<8x384xf32> to vector<8x128xf32>
    %15 = vector.extract_strided_slice %13 {offsets = [0, 0], sizes = [8, 128], strides = [1, 1]} : vector<8x384xf32> to vector<8x128xf32>
    %16 = arith.addf %14, %15 : vector<8x128xf32>
    %17 = arith.negf %16 : vector<8x128xf32>
    %18 = math.exp %17 : vector<8x128xf32>
    %cst_11 = arith.constant 1.000000e+00 : f32
    %19 = vector.broadcast %cst_11 : f32 to vector<8x128xf32>
    %20 = arith.addf %19, %18 : vector<8x128xf32>
    %21 = arith.divf %19, %20 : vector<8x128xf32>
    %22 = vector.extract_strided_slice %10 {offsets = [0, 128], sizes = [8, 128], strides = [1, 1]} : vector<8x384xf32> to vector<8x128xf32>
    %23 = vector.extract_strided_slice %13 {offsets = [0, 128], sizes = [8, 128], strides = [1, 1]} : vector<8x384xf32> to vector<8x128xf32>
    %24 = arith.addf %22, %23 : vector<8x128xf32>
    %25 = arith.negf %24 : vector<8x128xf32>
    %26 = math.exp %25 : vector<8x128xf32>
    %cst_12 = arith.constant 1.000000e+00 : f32
    %27 = vector.broadcast %cst_12 : f32 to vector<8x128xf32>
    %28 = arith.addf %27, %26 : vector<8x128xf32>
    %29 = arith.divf %27, %28 : vector<8x128xf32>
    %30 = vector.extract_strided_slice %10 {offsets = [0, 256], sizes = [8, 128], strides = [1, 1]} : vector<8x384xf32> to vector<8x128xf32>
    %31 = vector.extract_strided_slice %13 {offsets = [0, 256], sizes = [8, 128], strides = [1, 1]} : vector<8x384xf32> to vector<8x128xf32>
    %32 = arith.mulf %21, %31 : vector<8x128xf32>
    %33 = arith.addf %30, %32 : vector<8x128xf32>
    %34 = math.tanh %33 : vector<8x128xf32>
    %cst_13 = arith.constant 1.000000e+00 : f32
    %35 = vector.broadcast %cst_13 : f32 to vector<8x128xf32>
    %36 = arith.subf %35, %29 : vector<8x128xf32>
    %37 = arith.mulf %36, %34 : vector<8x128xf32>
    %38 = arith.mulf %29, %7 : vector<8x128xf32>
    %39 = arith.addf %37, %38 : vector<8x128xf32>
    %40 = arith.addi %6, %c0_i32_6 : i32
    %41 = vector.broadcast %40 : i32 to vector<8x1xi32>
    %42 = arith.cmpi sgt, %5, %41 : vector<8x1xi32>
    %43 = arith.extui %42 : vector<8x1xi1> to vector<8x1xi32>
    %44 = arith.sitofp %43 : vector<8x1xi32> to vector<8x1xf32>
    %45 = vector.broadcast %44 : vector<8x1xf32> to vector<8x128xf32>
    %46 = arith.mulf %45, %39 : vector<8x128xf32>
    %47 = arith.index_cast %c0_i32_6 : i32 to index
    %c0_14 = arith.constant 0 : index
    %c0_15 = arith.constant 0 : index
    %48 = vector.load %arg7[%47, %c0_14, %c0_15] : memref<8x8x128xf32, #tpu.memory_space<vmem>>, vector<1x8x128xf32>
    %49 = vector.shape_cast %48 : vector<1x8x128xf32> to vector<8x128xf32>
    %50 = vector.shape_cast %46 : vector<8x128xf32> to vector<1x8x128xf32>
    tpu.vector_store %arg7[%47, %c0_14, %c0_15], %50 {strides = array<i32>} : memref<8x8x128xf32, #tpu.memory_space<vmem>>, vector<1x8x128xf32>,
    %51 = vector.broadcast %44 : vector<8x1xf32> to vector<8x128xf32>
    %52 = arith.mulf %51, %39 : vector<8x128xf32>
    %cst_16 = arith.constant 1.000000e+00 : f32
    %53 = vector.broadcast %cst_16 : f32 to vector<8x1xf32>
    %54 = arith.subf %53, %44 : vector<8x1xf32>
    %55 = vector.broadcast %54 : vector<8x1xf32> to vector<8x128xf32>
    %56 = arith.mulf %55, %7 : vector<8x128xf32>
    %57 = arith.addf %52, %56 : vector<8x128xf32>
    %c0_17 = arith.constant 0 : index
    %c0_18 = arith.constant 0 : index
    %58 = vector.load %arg8[%c0_17, %c0_18] : memref<8x128xf32, #tpu.memory_space<vmem>>, vector<8x128xf32>
    tpu.vector_store %arg8[%c0_17, %c0_18], %57 {strides = array<i32>} : memref<8x128xf32, #tpu.memory_space<vmem>>, vector<8x128xf32>,
    %c1_i32 = arith.constant 1 : i32
    %c0_19 = arith.constant 0 : index
    %c0_20 = arith.constant 0 : index
    %59 = vector.load %arg8[%c0_19, %c0_20] : memref<8x128xf32, #tpu.memory_space<vmem>>, vector<8x128xf32>
    %60 = arith.index_cast %c1_i32 : i32 to index
    %c0_21 = arith.constant 0 : index
    %c0_22 = arith.constant 0 : index
    %61 = vector.load %arg6[%60, %c0_21, %c0_22] : memref<8x8x384xf32, #tpu.memory_space<vmem>>, vector<1x8x384xf32>
    %62 = vector.shape_cast %61 : vector<1x8x384xf32> to vector<8x384xf32>
    %cst_23 = arith.constant dense<0.000000e+00> : vector<8x384xf32>
    %63 = tpu.matmul %59, %3, %cst_23 {dimension_numbers = #tpu.dot_dimension_numbers<[1], [0], [0], [1], [0, 0, 1, 1], [], []>} : vector<8x128xf32>, vector<128x384xf32>, vector<8x384xf32> -> vector<8x384xf32>
    %64 = vector.broadcast %4 : vector<1x384xf32> to vector<8x384xf32>
    %65 = arith.addf %63, %64 : vector<8x384xf32>
    %66 = vector.extract_strided_slice %62 {offsets = [0, 0], sizes = [8, 128], strides = [1, 1]} : vector<8x384xf32> to vector<8x128xf32>
    %67 = vector.extract_strided_slice %65 {offsets = [0, 0], sizes = [8, 128], strides = [1, 1]} : vector<8x384xf32> to vector<8x128xf32>
    %68 = arith.addf %66, %67 : vector<8x128xf32>
    %69 = arith.negf %68 : vector<8x128xf32>
    %70 = math.exp %69 : vector<8x128xf32>
    %cst_24 = arith.constant 1.000000e+00 : f32
    %71 = vector.broadcast %cst_24 : f32 to vector<8x128xf32>
    %72 = arith.addf %71, %70 : vector<8x128xf32>
    %73 = arith.divf %71, %72 : vector<8x128xf32>
    %74 = vector.extract_strided_slice %62 {offsets = [0, 128], sizes = [8, 128], strides = [1, 1]} : vector<8x384xf32> to vector<8x128xf32>
    %75 = vector.extract_strided_slice %65 {offsets = [0, 128], sizes = [8, 128], strides = [1, 1]} : vector<8x384xf32> to vector<8x128xf32>
    %76 = arith.addf %74, %75 : vector<8x128xf32>
    %77 = arith.negf %76 : vector<8x128xf32>
    %78 = math.exp %77 : vector<8x128xf32>
    %cst_25 = arith.constant 1.000000e+00 : f32
    %79 = vector.broadcast %cst_25 : f32 to vector<8x128xf32>
    %80 = arith.addf %79, %78 : vector<8x128xf32>
    %81 = arith.divf %79, %80 : vector<8x128xf32>
    %82 = vector.extract_strided_slice %62 {offsets = [0, 256], sizes = [8, 128], strides = [1, 1]} : vector<8x384xf32> to vector<8x128xf32>
    %83 = vector.extract_strided_slice %65 {offsets = [0, 256], sizes = [8, 128], strides = [1, 1]} : vector<8x384xf32> to vector<8x128xf32>
    %84 = arith.mulf %73, %83 : vector<8x128xf32>
    %85 = arith.addf %82, %84 : vector<8x128xf32>
    %86 = math.tanh %85 : vector<8x128xf32>
    %cst_26 = arith.constant 1.000000e+00 : f32
    %87 = vector.broadcast %cst_26 : f32 to vector<8x128xf32>
    %88 = arith.subf %87, %81 : vector<8x128xf32>
    %89 = arith.mulf %88, %86 : vector<8x128xf32>
    %90 = arith.mulf %81, %59 : vector<8x128xf32>
    %91 = arith.addf %89, %90 : vector<8x128xf32>
    %92 = arith.addi %6, %c1_i32 : i32
    %93 = vector.broadcast %92 : i32 to vector<8x1xi32>
    %94 = arith.cmpi sgt, %5, %93 : vector<8x1xi32>
    %95 = arith.extui %94 : vector<8x1xi1> to vector<8x1xi32>
    %96 = arith.sitofp %95 : vector<8x1xi32> to vector<8x1xf32>
    %97 = vector.broadcast %96 : vector<8x1xf32> to vector<8x128xf32>
    %98 = arith.mulf %97, %91 : vector<8x128xf32>
    %99 = arith.index_cast %c1_i32 : i32 to index
    %c0_27 = arith.constant 0 : index
    %c0_28 = arith.constant 0 : index
    %100 = vector.load %arg7[%99, %c0_27, %c0_28] : memref<8x8x128xf32, #tpu.memory_space<vmem>>, vector<1x8x128xf32>
    %101 = vector.shape_cast %100 : vector<1x8x128xf32> to vector<8x128xf32>
    %102 = vector.shape_cast %98 : vector<8x128xf32> to vector<1x8x128xf32>
    tpu.vector_store %arg7[%99, %c0_27, %c0_28], %102 {strides = array<i32>} : memref<8x8x128xf32, #tpu.memory_space<vmem>>, vector<1x8x128xf32>,
    %103 = vector.broadcast %96 : vector<8x1xf32> to vector<8x128xf32>
    %104 = arith.mulf %103, %91 : vector<8x128xf32>
    %cst_29 = arith.constant 1.000000e+00 : f32
    %105 = vector.broadcast %cst_29 : f32 to vector<8x1xf32>
    %106 = arith.subf %105, %96 : vector<8x1xf32>
    %107 = vector.broadcast %106 : vector<8x1xf32> to vector<8x128xf32>
    %108 = arith.mulf %107, %59 : vector<8x128xf32>
    %109 = arith.addf %104, %108 : vector<8x128xf32>
    %c0_30 = arith.constant 0 : index
    %c0_31 = arith.constant 0 : index
    %110 = vector.load %arg8[%c0_30, %c0_31] : memref<8x128xf32, #tpu.memory_space<vmem>>, vector<8x128xf32>
    tpu.vector_store %arg8[%c0_30, %c0_31], %109 {strides = array<i32>} : memref<8x128xf32, #tpu.memory_space<vmem>>, vector<8x128xf32>,
    %c2_i32 = arith.constant 2 : i32
    %c0_32 = arith.constant 0 : index
    %c0_33 = arith.constant 0 : index
    %111 = vector.load %arg8[%c0_32, %c0_33] : memref<8x128xf32, #tpu.memory_space<vmem>>, vector<8x128xf32>
    %112 = arith.index_cast %c2_i32 : i32 to index
    %c0_34 = arith.constant 0 : index
    %c0_35 = arith.constant 0 : index
    %113 = vector.load %arg6[%112, %c0_34, %c0_35] : memref<8x8x384xf32, #tpu.memory_space<vmem>>, vector<1x8x384xf32>
    %114 = vector.shape_cast %113 : vector<1x8x384xf32> to vector<8x384xf32>
    %cst_36 = arith.constant dense<0.000000e+00> : vector<8x384xf32>
    %115 = tpu.matmul %111, %3, %cst_36 {dimension_numbers = #tpu.dot_dimension_numbers<[1], [0], [0], [1], [0, 0, 1, 1], [], []>} : vector<8x128xf32>, vector<128x384xf32>, vector<8x384xf32> -> vector<8x384xf32>
    %116 = vector.broadcast %4 : vector<1x384xf32> to vector<8x384xf32>
    %117 = arith.addf %115, %116 : vector<8x384xf32>
    %118 = vector.extract_strided_slice %114 {offsets = [0, 0], sizes = [8, 128], strides = [1, 1]} : vector<8x384xf32> to vector<8x128xf32>
    %119 = vector.extract_strided_slice %117 {offsets = [0, 0], sizes = [8, 128], strides = [1, 1]} : vector<8x384xf32> to vector<8x128xf32>
    %120 = arith.addf %118, %119 : vector<8x128xf32>
    %121 = arith.negf %120 : vector<8x128xf32>
    %122 = math.exp %121 : vector<8x128xf32>
    %cst_37 = arith.constant 1.000000e+00 : f32
    %123 = vector.broadcast %cst_37 : f32 to vector<8x128xf32>
    %124 = arith.addf %123, %122 : vector<8x128xf32>
    %125 = arith.divf %123, %124 : vector<8x128xf32>
    %126 = vector.extract_strided_slice %114 {offsets = [0, 128], sizes = [8, 128], strides = [1, 1]} : vector<8x384xf32> to vector<8x128xf32>
    %127 = vector.extract_strided_slice %117 {offsets = [0, 128], sizes = [8, 128], strides = [1, 1]} : vector<8x384xf32> to vector<8x128xf32>
    %128 = arith.addf %126, %127 : vector<8x128xf32>
    %129 = arith.negf %128 : vector<8x128xf32>
    %130 = math.exp %129 : vector<8x128xf32>
    %cst_38 = arith.constant 1.000000e+00 : f32
    %131 = vector.broadcast %cst_38 : f32 to vector<8x128xf32>
    %132 = arith.addf %131, %130 : vector<8x128xf32>
    %133 = arith.divf %131, %132 : vector<8x128xf32>
    %134 = vector.extract_strided_slice %114 {offsets = [0, 256], sizes = [8, 128], strides = [1, 1]} : vector<8x384xf32> to vector<8x128xf32>
    %135 = vector.extract_strided_slice %117 {offsets = [0, 256], sizes = [8, 128], strides = [1, 1]} : vector<8x384xf32> to vector<8x128xf32>
    %136 = arith.mulf %125, %135 : vector<8x128xf32>
    %137 = arith.addf %134, %136 : vector<8x128xf32>
    %138 = math.tanh %137 : vector<8x128xf32>
    %cst_39 = arith.constant 1.000000e+00 : f32
    %139 = vector.broadcast %cst_39 : f32 to vector<8x128xf32>
    %140 = arith.subf %139, %133 : vector<8x128xf32>
    %141 = arith.mulf %140, %138 : vector<8x128xf32>
    %142 = arith.mulf %133, %111 : vector<8x128xf32>
    %143 = arith.addf %141, %142 : vector<8x128xf32>
    %144 = arith.addi %6, %c2_i32 : i32
    %145 = vector.broadcast %144 : i32 to vector<8x1xi32>
    %146 = arith.cmpi sgt, %5, %145 : vector<8x1xi32>
    %147 = arith.extui %146 : vector<8x1xi1> to vector<8x1xi32>
    %148 = arith.sitofp %147 : vector<8x1xi32> to vector<8x1xf32>
    %149 = vector.broadcast %148 : vector<8x1xf32> to vector<8x128xf32>
    %150 = arith.mulf %149, %143 : vector<8x128xf32>
    %151 = arith.index_cast %c2_i32 : i32 to index
    %c0_40 = arith.constant 0 : index
    %c0_41 = arith.constant 0 : index
    %152 = vector.load %arg7[%151, %c0_40, %c0_41] : memref<8x8x128xf32, #tpu.memory_space<vmem>>, vector<1x8x128xf32>
    %153 = vector.shape_cast %152 : vector<1x8x128xf32> to vector<8x128xf32>
    %154 = vector.shape_cast %150 : vector<8x128xf32> to vector<1x8x128xf32>
    tpu.vector_store %arg7[%151, %c0_40, %c0_41], %154 {strides = array<i32>} : memref<8x8x128xf32, #tpu.memory_space<vmem>>, vector<1x8x128xf32>,
    %155 = vector.broadcast %148 : vector<8x1xf32> to vector<8x128xf32>
    %156 = arith.mulf %155, %143 : vector<8x128xf32>
    %cst_42 = arith.constant 1.000000e+00 : f32
    %157 = vector.broadcast %cst_42 : f32 to vector<8x1xf32>
    %158 = arith.subf %157, %148 : vector<8x1xf32>
    %159 = vector.broadcast %158 : vector<8x1xf32> to vector<8x128xf32>
    %160 = arith.mulf %159, %111 : vector<8x128xf32>
    %161 = arith.addf %156, %160 : vector<8x128xf32>
    %c0_43 = arith.constant 0 : index
    %c0_44 = arith.constant 0 : index
    %162 = vector.load %arg8[%c0_43, %c0_44] : memref<8x128xf32, #tpu.memory_space<vmem>>, vector<8x128xf32>
    tpu.vector_store %arg8[%c0_43, %c0_44], %161 {strides = array<i32>} : memref<8x128xf32, #tpu.memory_space<vmem>>, vector<8x128xf32>,
    %c3_i32 = arith.constant 3 : i32
    %c0_45 = arith.constant 0 : index
    %c0_46 = arith.constant 0 : index
    %163 = vector.load %arg8[%c0_45, %c0_46] : memref<8x128xf32, #tpu.memory_space<vmem>>, vector<8x128xf32>
    %164 = arith.index_cast %c3_i32 : i32 to index
    %c0_47 = arith.constant 0 : index
    %c0_48 = arith.constant 0 : index
    %165 = vector.load %arg6[%164, %c0_47, %c0_48] : memref<8x8x384xf32, #tpu.memory_space<vmem>>, vector<1x8x384xf32>
    %166 = vector.shape_cast %165 : vector<1x8x384xf32> to vector<8x384xf32>
    %cst_49 = arith.constant dense<0.000000e+00> : vector<8x384xf32>
    %167 = tpu.matmul %163, %3, %cst_49 {dimension_numbers = #tpu.dot_dimension_numbers<[1], [0], [0], [1], [0, 0, 1, 1], [], []>} : vector<8x128xf32>, vector<128x384xf32>, vector<8x384xf32> -> vector<8x384xf32>
    %168 = vector.broadcast %4 : vector<1x384xf32> to vector<8x384xf32>
    %169 = arith.addf %167, %168 : vector<8x384xf32>
    %170 = vector.extract_strided_slice %166 {offsets = [0, 0], sizes = [8, 128], strides = [1, 1]} : vector<8x384xf32> to vector<8x128xf32>
    %171 = vector.extract_strided_slice %169 {offsets = [0, 0], sizes = [8, 128], strides = [1, 1]} : vector<8x384xf32> to vector<8x128xf32>
    %172 = arith.addf %170, %171 : vector<8x128xf32>
    %173 = arith.negf %172 : vector<8x128xf32>
    %174 = math.exp %173 : vector<8x128xf32>
    %cst_50 = arith.constant 1.000000e+00 : f32
    %175 = vector.broadcast %cst_50 : f32 to vector<8x128xf32>
    %176 = arith.addf %175, %174 : vector<8x128xf32>
    %177 = arith.divf %175, %176 : vector<8x128xf32>
    %178 = vector.extract_strided_slice %166 {offsets = [0, 128], sizes = [8, 128], strides = [1, 1]} : vector<8x384xf32> to vector<8x128xf32>
    %179 = vector.extract_strided_slice %169 {offsets = [0, 128], sizes = [8, 128], strides = [1, 1]} : vector<8x384xf32> to vector<8x128xf32>
    %180 = arith.addf %178, %179 : vector<8x128xf32>
    %181 = arith.negf %180 : vector<8x128xf32>
    %182 = math.exp %181 : vector<8x128xf32>
    %cst_51 = arith.constant 1.000000e+00 : f32
    %183 = vector.broadcast %cst_51 : f32 to vector<8x128xf32>
    %184 = arith.addf %183, %182 : vector<8x128xf32>
    %185 = arith.divf %183, %184 : vector<8x128xf32>
    %186 = vector.extract_strided_slice %166 {offsets = [0, 256], sizes = [8, 128], strides = [1, 1]} : vector<8x384xf32> to vector<8x128xf32>
    %187 = vector.extract_strided_slice %169 {offsets = [0, 256], sizes = [8, 128], strides = [1, 1]} : vector<8x384xf32> to vector<8x128xf32>
    %188 = arith.mulf %177, %187 : vector<8x128xf32>
    %189 = arith.addf %186, %188 : vector<8x128xf32>
    %190 = math.tanh %189 : vector<8x128xf32>
    %cst_52 = arith.constant 1.000000e+00 : f32
    %191 = vector.broadcast %cst_52 : f32 to vector<8x128xf32>
    %192 = arith.subf %191, %185 : vector<8x128xf32>
    %193 = arith.mulf %192, %190 : vector<8x128xf32>
    %194 = arith.mulf %185, %163 : vector<8x128xf32>
    %195 = arith.addf %193, %194 : vector<8x128xf32>
    %196 = arith.addi %6, %c3_i32 : i32
    %197 = vector.broadcast %196 : i32 to vector<8x1xi32>
    %198 = arith.cmpi sgt, %5, %197 : vector<8x1xi32>
    %199 = arith.extui %198 : vector<8x1xi1> to vector<8x1xi32>
    %200 = arith.sitofp %199 : vector<8x1xi32> to vector<8x1xf32>
    %201 = vector.broadcast %200 : vector<8x1xf32> to vector<8x128xf32>
    %202 = arith.mulf %201, %195 : vector<8x128xf32>
    %203 = arith.index_cast %c3_i32 : i32 to index
    %c0_53 = arith.constant 0 : index
    %c0_54 = arith.constant 0 : index
    %204 = vector.load %arg7[%203, %c0_53, %c0_54] : memref<8x8x128xf32, #tpu.memory_space<vmem>>, vector<1x8x128xf32>
    %205 = vector.shape_cast %204 : vector<1x8x128xf32> to vector<8x128xf32>
    %206 = vector.shape_cast %202 : vector<8x128xf32> to vector<1x8x128xf32>
    tpu.vector_store %arg7[%203, %c0_53, %c0_54], %206 {strides = array<i32>} : memref<8x8x128xf32, #tpu.memory_space<vmem>>, vector<1x8x128xf32>,
    %207 = vector.broadcast %200 : vector<8x1xf32> to vector<8x128xf32>
    %208 = arith.mulf %207, %195 : vector<8x128xf32>
    %cst_55 = arith.constant 1.000000e+00 : f32
    %209 = vector.broadcast %cst_55 : f32 to vector<8x1xf32>
    %210 = arith.subf %209, %200 : vector<8x1xf32>
    %211 = vector.broadcast %210 : vector<8x1xf32> to vector<8x128xf32>
    %212 = arith.mulf %211, %163 : vector<8x128xf32>
    %213 = arith.addf %208, %212 : vector<8x128xf32>
    %c0_56 = arith.constant 0 : index
    %c0_57 = arith.constant 0 : index
    %214 = vector.load %arg8[%c0_56, %c0_57] : memref<8x128xf32, #tpu.memory_space<vmem>>, vector<8x128xf32>
    tpu.vector_store %arg8[%c0_56, %c0_57], %213 {strides = array<i32>} : memref<8x128xf32, #tpu.memory_space<vmem>>, vector<8x128xf32>,
    %c4_i32 = arith.constant 4 : i32
    %c0_58 = arith.constant 0 : index
    %c0_59 = arith.constant 0 : index
    %215 = vector.load %arg8[%c0_58, %c0_59] : memref<8x128xf32, #tpu.memory_space<vmem>>, vector<8x128xf32>
    %216 = arith.index_cast %c4_i32 : i32 to index
    %c0_60 = arith.constant 0 : index
    %c0_61 = arith.constant 0 : index
    %217 = vector.load %arg6[%216, %c0_60, %c0_61] : memref<8x8x384xf32, #tpu.memory_space<vmem>>, vector<1x8x384xf32>
    %218 = vector.shape_cast %217 : vector<1x8x384xf32> to vector<8x384xf32>
    %cst_62 = arith.constant dense<0.000000e+00> : vector<8x384xf32>
    %219 = tpu.matmul %215, %3, %cst_62 {dimension_numbers = #tpu.dot_dimension_numbers<[1], [0], [0], [1], [0, 0, 1, 1], [], []>} : vector<8x128xf32>, vector<128x384xf32>, vector<8x384xf32> -> vector<8x384xf32>
    %220 = vector.broadcast %4 : vector<1x384xf32> to vector<8x384xf32>
    %221 = arith.addf %219, %220 : vector<8x384xf32>
    %222 = vector.extract_strided_slice %218 {offsets = [0, 0], sizes = [8, 128], strides = [1, 1]} : vector<8x384xf32> to vector<8x128xf32>
    %223 = vector.extract_strided_slice %221 {offsets = [0, 0], sizes = [8, 128], strides = [1, 1]} : vector<8x384xf32> to vector<8x128xf32>
    %224 = arith.addf %222, %223 : vector<8x128xf32>
    %225 = arith.negf %224 : vector<8x128xf32>
    %226 = math.exp %225 : vector<8x128xf32>
    %cst_63 = arith.constant 1.000000e+00 : f32
    %227 = vector.broadcast %cst_63 : f32 to vector<8x128xf32>
    %228 = arith.addf %227, %226 : vector<8x128xf32>
    %229 = arith.divf %227, %228 : vector<8x128xf32>
    %230 = vector.extract_strided_slice %218 {offsets = [0, 128], sizes = [8, 128], strides = [1, 1]} : vector<8x384xf32> to vector<8x128xf32>
    %231 = vector.extract_strided_slice %221 {offsets = [0, 128], sizes = [8, 128], strides = [1, 1]} : vector<8x384xf32> to vector<8x128xf32>
    %232 = arith.addf %230, %231 : vector<8x128xf32>
    %233 = arith.negf %232 : vector<8x128xf32>
    %234 = math.exp %233 : vector<8x128xf32>
    %cst_64 = arith.constant 1.000000e+00 : f32
    %235 = vector.broadcast %cst_64 : f32 to vector<8x128xf32>
    %236 = arith.addf %235, %234 : vector<8x128xf32>
    %237 = arith.divf %235, %236 : vector<8x128xf32>
    %238 = vector.extract_strided_slice %218 {offsets = [0, 256], sizes = [8, 128], strides = [1, 1]} : vector<8x384xf32> to vector<8x128xf32>
    %239 = vector.extract_strided_slice %221 {offsets = [0, 256], sizes = [8, 128], strides = [1, 1]} : vector<8x384xf32> to vector<8x128xf32>
    %240 = arith.mulf %229, %239 : vector<8x128xf32>
    %241 = arith.addf %238, %240 : vector<8x128xf32>
    %242 = math.tanh %241 : vector<8x128xf32>
    %cst_65 = arith.constant 1.000000e+00 : f32
    %243 = vector.broadcast %cst_65 : f32 to vector<8x128xf32>
    %244 = arith.subf %243, %237 : vector<8x128xf32>
    %245 = arith.mulf %244, %242 : vector<8x128xf32>
    %246 = arith.mulf %237, %215 : vector<8x128xf32>
    %247 = arith.addf %245, %246 : vector<8x128xf32>
    %248 = arith.addi %6, %c4_i32 : i32
    %249 = vector.broadcast %248 : i32 to vector<8x1xi32>
    %250 = arith.cmpi sgt, %5, %249 : vector<8x1xi32>
    %251 = arith.extui %250 : vector<8x1xi1> to vector<8x1xi32>
    %252 = arith.sitofp %251 : vector<8x1xi32> to vector<8x1xf32>
    %253 = vector.broadcast %252 : vector<8x1xf32> to vector<8x128xf32>
    %254 = arith.mulf %253, %247 : vector<8x128xf32>
    %255 = arith.index_cast %c4_i32 : i32 to index
    %c0_66 = arith.constant 0 : index
    %c0_67 = arith.constant 0 : index
    %256 = vector.load %arg7[%255, %c0_66, %c0_67] : memref<8x8x128xf32, #tpu.memory_space<vmem>>, vector<1x8x128xf32>
    %257 = vector.shape_cast %256 : vector<1x8x128xf32> to vector<8x128xf32>
    %258 = vector.shape_cast %254 : vector<8x128xf32> to vector<1x8x128xf32>
    tpu.vector_store %arg7[%255, %c0_66, %c0_67], %258 {strides = array<i32>} : memref<8x8x128xf32, #tpu.memory_space<vmem>>, vector<1x8x128xf32>,
    %259 = vector.broadcast %252 : vector<8x1xf32> to vector<8x128xf32>
    %260 = arith.mulf %259, %247 : vector<8x128xf32>
    %cst_68 = arith.constant 1.000000e+00 : f32
    %261 = vector.broadcast %cst_68 : f32 to vector<8x1xf32>
    %262 = arith.subf %261, %252 : vector<8x1xf32>
    %263 = vector.broadcast %262 : vector<8x1xf32> to vector<8x128xf32>
    %264 = arith.mulf %263, %215 : vector<8x128xf32>
    %265 = arith.addf %260, %264 : vector<8x128xf32>
    %c0_69 = arith.constant 0 : index
    %c0_70 = arith.constant 0 : index
    %266 = vector.load %arg8[%c0_69, %c0_70] : memref<8x128xf32, #tpu.memory_space<vmem>>, vector<8x128xf32>
    tpu.vector_store %arg8[%c0_69, %c0_70], %265 {strides = array<i32>} : memref<8x128xf32, #tpu.memory_space<vmem>>, vector<8x128xf32>,
    %c5_i32 = arith.constant 5 : i32
    %c0_71 = arith.constant 0 : index
    %c0_72 = arith.constant 0 : index
    %267 = vector.load %arg8[%c0_71, %c0_72] : memref<8x128xf32, #tpu.memory_space<vmem>>, vector<8x128xf32>
    %268 = arith.index_cast %c5_i32 : i32 to index
    %c0_73 = arith.constant 0 : index
    %c0_74 = arith.constant 0 : index
    %269 = vector.load %arg6[%268, %c0_73, %c0_74] : memref<8x8x384xf32, #tpu.memory_space<vmem>>, vector<1x8x384xf32>
    %270 = vector.shape_cast %269 : vector<1x8x384xf32> to vector<8x384xf32>
    %cst_75 = arith.constant dense<0.000000e+00> : vector<8x384xf32>
    %271 = tpu.matmul %267, %3, %cst_75 {dimension_numbers = #tpu.dot_dimension_numbers<[1], [0], [0], [1], [0, 0, 1, 1], [], []>} : vector<8x128xf32>, vector<128x384xf32>, vector<8x384xf32> -> vector<8x384xf32>
    %272 = vector.broadcast %4 : vector<1x384xf32> to vector<8x384xf32>
    %273 = arith.addf %271, %272 : vector<8x384xf32>
    %274 = vector.extract_strided_slice %270 {offsets = [0, 0], sizes = [8, 128], strides = [1, 1]} : vector<8x384xf32> to vector<8x128xf32>
    %275 = vector.extract_strided_slice %273 {offsets = [0, 0], sizes = [8, 128], strides = [1, 1]} : vector<8x384xf32> to vector<8x128xf32>
    %276 = arith.addf %274, %275 : vector<8x128xf32>
    %277 = arith.negf %276 : vector<8x128xf32>
    %278 = math.exp %277 : vector<8x128xf32>
    %cst_76 = arith.constant 1.000000e+00 : f32
    %279 = vector.broadcast %cst_76 : f32 to vector<8x128xf32>
    %280 = arith.addf %279, %278 : vector<8x128xf32>
    %281 = arith.divf %279, %280 : vector<8x128xf32>
    %282 = vector.extract_strided_slice %270 {offsets = [0, 128], sizes = [8, 128], strides = [1, 1]} : vector<8x384xf32> to vector<8x128xf32>
    %283 = vector.extract_strided_slice %273 {offsets = [0, 128], sizes = [8, 128], strides = [1, 1]} : vector<8x384xf32> to vector<8x128xf32>
    %284 = arith.addf %282, %283 : vector<8x128xf32>
    %285 = arith.negf %284 : vector<8x128xf32>
    %286 = math.exp %285 : vector<8x128xf32>
    %cst_77 = arith.constant 1.000000e+00 : f32
    %287 = vector.broadcast %cst_77 : f32 to vector<8x128xf32>
    %288 = arith.addf %287, %286 : vector<8x128xf32>
    %289 = arith.divf %287, %288 : vector<8x128xf32>
    %290 = vector.extract_strided_slice %270 {offsets = [0, 256], sizes = [8, 128], strides = [1, 1]} : vector<8x384xf32> to vector<8x128xf32>
    %291 = vector.extract_strided_slice %273 {offsets = [0, 256], sizes = [8, 128], strides = [1, 1]} : vector<8x384xf32> to vector<8x128xf32>
    %292 = arith.mulf %281, %291 : vector<8x128xf32>
    %293 = arith.addf %290, %292 : vector<8x128xf32>
    %294 = math.tanh %293 : vector<8x128xf32>
    %cst_78 = arith.constant 1.000000e+00 : f32
    %295 = vector.broadcast %cst_78 : f32 to vector<8x128xf32>
    %296 = arith.subf %295, %289 : vector<8x128xf32>
    %297 = arith.mulf %296, %294 : vector<8x128xf32>
    %298 = arith.mulf %289, %267 : vector<8x128xf32>
    %299 = arith.addf %297, %298 : vector<8x128xf32>
    %300 = arith.addi %6, %c5_i32 : i32
    %301 = vector.broadcast %300 : i32 to vector<8x1xi32>
    %302 = arith.cmpi sgt, %5, %301 : vector<8x1xi32>
    %303 = arith.extui %302 : vector<8x1xi1> to vector<8x1xi32>
    %304 = arith.sitofp %303 : vector<8x1xi32> to vector<8x1xf32>
    %305 = vector.broadcast %304 : vector<8x1xf32> to vector<8x128xf32>
    %306 = arith.mulf %305, %299 : vector<8x128xf32>
    %307 = arith.index_cast %c5_i32 : i32 to index
    %c0_79 = arith.constant 0 : index
    %c0_80 = arith.constant 0 : index
    %308 = vector.load %arg7[%307, %c0_79, %c0_80] : memref<8x8x128xf32, #tpu.memory_space<vmem>>, vector<1x8x128xf32>
    %309 = vector.shape_cast %308 : vector<1x8x128xf32> to vector<8x128xf32>
    %310 = vector.shape_cast %306 : vector<8x128xf32> to vector<1x8x128xf32>
    tpu.vector_store %arg7[%307, %c0_79, %c0_80], %310 {strides = array<i32>} : memref<8x8x128xf32, #tpu.memory_space<vmem>>, vector<1x8x128xf32>,
    %311 = vector.broadcast %304 : vector<8x1xf32> to vector<8x128xf32>
    %312 = arith.mulf %311, %299 : vector<8x128xf32>
    %cst_81 = arith.constant 1.000000e+00 : f32
    %313 = vector.broadcast %cst_81 : f32 to vector<8x1xf32>
    %314 = arith.subf %313, %304 : vector<8x1xf32>
    %315 = vector.broadcast %314 : vector<8x1xf32> to vector<8x128xf32>
    %316 = arith.mulf %315, %267 : vector<8x128xf32>
    %317 = arith.addf %312, %316 : vector<8x128xf32>
    %c0_82 = arith.constant 0 : index
    %c0_83 = arith.constant 0 : index
    %318 = vector.load %arg8[%c0_82, %c0_83] : memref<8x128xf32, #tpu.memory_space<vmem>>, vector<8x128xf32>
    tpu.vector_store %arg8[%c0_82, %c0_83], %317 {strides = array<i32>} : memref<8x128xf32, #tpu.memory_space<vmem>>, vector<8x128xf32>,
    %c6_i32 = arith.constant 6 : i32
    %c0_84 = arith.constant 0 : index
    %c0_85 = arith.constant 0 : index
    %319 = vector.load %arg8[%c0_84, %c0_85] : memref<8x128xf32, #tpu.memory_space<vmem>>, vector<8x128xf32>
    %320 = arith.index_cast %c6_i32 : i32 to index
    %c0_86 = arith.constant 0 : index
    %c0_87 = arith.constant 0 : index
    %321 = vector.load %arg6[%320, %c0_86, %c0_87] : memref<8x8x384xf32, #tpu.memory_space<vmem>>, vector<1x8x384xf32>
    %322 = vector.shape_cast %321 : vector<1x8x384xf32> to vector<8x384xf32>
    %cst_88 = arith.constant dense<0.000000e+00> : vector<8x384xf32>
    %323 = tpu.matmul %319, %3, %cst_88 {dimension_numbers = #tpu.dot_dimension_numbers<[1], [0], [0], [1], [0, 0, 1, 1], [], []>} : vector<8x128xf32>, vector<128x384xf32>, vector<8x384xf32> -> vector<8x384xf32>
    %324 = vector.broadcast %4 : vector<1x384xf32> to vector<8x384xf32>
    %325 = arith.addf %323, %324 : vector<8x384xf32>
    %326 = vector.extract_strided_slice %322 {offsets = [0, 0], sizes = [8, 128], strides = [1, 1]} : vector<8x384xf32> to vector<8x128xf32>
    %327 = vector.extract_strided_slice %325 {offsets = [0, 0], sizes = [8, 128], strides = [1, 1]} : vector<8x384xf32> to vector<8x128xf32>
    %328 = arith.addf %326, %327 : vector<8x128xf32>
    %329 = arith.negf %328 : vector<8x128xf32>
    %330 = math.exp %329 : vector<8x128xf32>
    %cst_89 = arith.constant 1.000000e+00 : f32
    %331 = vector.broadcast %cst_89 : f32 to vector<8x128xf32>
    %332 = arith.addf %331, %330 : vector<8x128xf32>
    %333 = arith.divf %331, %332 : vector<8x128xf32>
    %334 = vector.extract_strided_slice %322 {offsets = [0, 128], sizes = [8, 128], strides = [1, 1]} : vector<8x384xf32> to vector<8x128xf32>
    %335 = vector.extract_strided_slice %325 {offsets = [0, 128], sizes = [8, 128], strides = [1, 1]} : vector<8x384xf32> to vector<8x128xf32>
    %336 = arith.addf %334, %335 : vector<8x128xf32>
    %337 = arith.negf %336 : vector<8x128xf32>
    %338 = math.exp %337 : vector<8x128xf32>
    %cst_90 = arith.constant 1.000000e+00 : f32
    %339 = vector.broadcast %cst_90 : f32 to vector<8x128xf32>
    %340 = arith.addf %339, %338 : vector<8x128xf32>
    %341 = arith.divf %339, %340 : vector<8x128xf32>
    %342 = vector.extract_strided_slice %322 {offsets = [0, 256], sizes = [8, 128], strides = [1, 1]} : vector<8x384xf32> to vector<8x128xf32>
    %343 = vector.extract_strided_slice %325 {offsets = [0, 256], sizes = [8, 128], strides = [1, 1]} : vector<8x384xf32> to vector<8x128xf32>
    %344 = arith.mulf %333, %343 : vector<8x128xf32>
    %345 = arith.addf %342, %344 : vector<8x128xf32>
    %346 = math.tanh %345 : vector<8x128xf32>
    %cst_91 = arith.constant 1.000000e+00 : f32
    %347 = vector.broadcast %cst_91 : f32 to vector<8x128xf32>
    %348 = arith.subf %347, %341 : vector<8x128xf32>
    %349 = arith.mulf %348, %346 : vector<8x128xf32>
    %350 = arith.mulf %341, %319 : vector<8x128xf32>
    %351 = arith.addf %349, %350 : vector<8x128xf32>
    %352 = arith.addi %6, %c6_i32 : i32
    %353 = vector.broadcast %352 : i32 to vector<8x1xi32>
    %354 = arith.cmpi sgt, %5, %353 : vector<8x1xi32>
    %355 = arith.extui %354 : vector<8x1xi1> to vector<8x1xi32>
    %356 = arith.sitofp %355 : vector<8x1xi32> to vector<8x1xf32>
    %357 = vector.broadcast %356 : vector<8x1xf32> to vector<8x128xf32>
    %358 = arith.mulf %357, %351 : vector<8x128xf32>
    %359 = arith.index_cast %c6_i32 : i32 to index
    %c0_92 = arith.constant 0 : index
    %c0_93 = arith.constant 0 : index
    %360 = vector.load %arg7[%359, %c0_92, %c0_93] : memref<8x8x128xf32, #tpu.memory_space<vmem>>, vector<1x8x128xf32>
    %361 = vector.shape_cast %360 : vector<1x8x128xf32> to vector<8x128xf32>
    %362 = vector.shape_cast %358 : vector<8x128xf32> to vector<1x8x128xf32>
    tpu.vector_store %arg7[%359, %c0_92, %c0_93], %362 {strides = array<i32>} : memref<8x8x128xf32, #tpu.memory_space<vmem>>, vector<1x8x128xf32>,
    %363 = vector.broadcast %356 : vector<8x1xf32> to vector<8x128xf32>
    %364 = arith.mulf %363, %351 : vector<8x128xf32>
    %cst_94 = arith.constant 1.000000e+00 : f32
    %365 = vector.broadcast %cst_94 : f32 to vector<8x1xf32>
    %366 = arith.subf %365, %356 : vector<8x1xf32>
    %367 = vector.broadcast %366 : vector<8x1xf32> to vector<8x128xf32>
    %368 = arith.mulf %367, %319 : vector<8x128xf32>
    %369 = arith.addf %364, %368 : vector<8x128xf32>
    %c0_95 = arith.constant 0 : index
    %c0_96 = arith.constant 0 : index
    %370 = vector.load %arg8[%c0_95, %c0_96] : memref<8x128xf32, #tpu.memory_space<vmem>>, vector<8x128xf32>
    tpu.vector_store %arg8[%c0_95, %c0_96], %369 {strides = array<i32>} : memref<8x128xf32, #tpu.memory_space<vmem>>, vector<8x128xf32>,
    %c7_i32 = arith.constant 7 : i32
    %c0_97 = arith.constant 0 : index
    %c0_98 = arith.constant 0 : index
    %371 = vector.load %arg8[%c0_97, %c0_98] : memref<8x128xf32, #tpu.memory_space<vmem>>, vector<8x128xf32>
    %372 = arith.index_cast %c7_i32 : i32 to index
    %c0_99 = arith.constant 0 : index
    %c0_100 = arith.constant 0 : index
    %373 = vector.load %arg6[%372, %c0_99, %c0_100] : memref<8x8x384xf32, #tpu.memory_space<vmem>>, vector<1x8x384xf32>
    %374 = vector.shape_cast %373 : vector<1x8x384xf32> to vector<8x384xf32>
    %cst_101 = arith.constant dense<0.000000e+00> : vector<8x384xf32>
    %375 = tpu.matmul %371, %3, %cst_101 {dimension_numbers = #tpu.dot_dimension_numbers<[1], [0], [0], [1], [0, 0, 1, 1], [], []>} : vector<8x128xf32>, vector<128x384xf32>, vector<8x384xf32> -> vector<8x384xf32>
    %376 = vector.broadcast %4 : vector<1x384xf32> to vector<8x384xf32>
    %377 = arith.addf %375, %376 : vector<8x384xf32>
    %378 = vector.extract_strided_slice %374 {offsets = [0, 0], sizes = [8, 128], strides = [1, 1]} : vector<8x384xf32> to vector<8x128xf32>
    %379 = vector.extract_strided_slice %377 {offsets = [0, 0], sizes = [8, 128], strides = [1, 1]} : vector<8x384xf32> to vector<8x128xf32>
    %380 = arith.addf %378, %379 : vector<8x128xf32>
    %381 = arith.negf %380 : vector<8x128xf32>
    %382 = math.exp %381 : vector<8x128xf32>
    %cst_102 = arith.constant 1.000000e+00 : f32
    %383 = vector.broadcast %cst_102 : f32 to vector<8x128xf32>
    %384 = arith.addf %383, %382 : vector<8x128xf32>
    %385 = arith.divf %383, %384 : vector<8x128xf32>
    %386 = vector.extract_strided_slice %374 {offsets = [0, 128], sizes = [8, 128], strides = [1, 1]} : vector<8x384xf32> to vector<8x128xf32>
    %387 = vector.extract_strided_slice %377 {offsets = [0, 128], sizes = [8, 128], strides = [1, 1]} : vector<8x384xf32> to vector<8x128xf32>
    %388 = arith.addf %386, %387 : vector<8x128xf32>
    %389 = arith.negf %388 : vector<8x128xf32>
    %390 = math.exp %389 : vector<8x128xf32>
    %cst_103 = arith.constant 1.000000e+00 : f32
    %391 = vector.broadcast %cst_103 : f32 to vector<8x128xf32>
    %392 = arith.addf %391, %390 : vector<8x128xf32>
    %393 = arith.divf %391, %392 : vector<8x128xf32>
    %394 = vector.extract_strided_slice %374 {offsets = [0, 256], sizes = [8, 128], strides = [1, 1]} : vector<8x384xf32> to vector<8x128xf32>
    %395 = vector.extract_strided_slice %377 {offsets = [0, 256], sizes = [8, 128], strides = [1, 1]} : vector<8x384xf32> to vector<8x128xf32>
    %396 = arith.mulf %385, %395 : vector<8x128xf32>
    %397 = arith.addf %394, %396 : vector<8x128xf32>
    %398 = math.tanh %397 : vector<8x128xf32>
    %cst_104 = arith.constant 1.000000e+00 : f32
    %399 = vector.broadcast %cst_104 : f32 to vector<8x128xf32>
    %400 = arith.subf %399, %393 : vector<8x128xf32>
    %401 = arith.mulf %400, %398 : vector<8x128xf32>
    %402 = arith.mulf %393, %371 : vector<8x128xf32>
    %403 = arith.addf %401, %402 : vector<8x128xf32>
    %404 = arith.addi %6, %c7_i32 : i32
    %405 = vector.broadcast %404 : i32 to vector<8x1xi32>
    %406 = arith.cmpi sgt, %5, %405 : vector<8x1xi32>
    %407 = arith.extui %406 : vector<8x1xi1> to vector<8x1xi32>
    %408 = arith.sitofp %407 : vector<8x1xi32> to vector<8x1xf32>
    %409 = vector.broadcast %408 : vector<8x1xf32> to vector<8x128xf32>
    %410 = arith.mulf %409, %403 : vector<8x128xf32>
    %411 = arith.index_cast %c7_i32 : i32 to index
    %c0_105 = arith.constant 0 : index
    %c0_106 = arith.constant 0 : index
    %412 = vector.load %arg7[%411, %c0_105, %c0_106] : memref<8x8x128xf32, #tpu.memory_space<vmem>>, vector<1x8x128xf32>
    %413 = vector.shape_cast %412 : vector<1x8x128xf32> to vector<8x128xf32>
    %414 = vector.shape_cast %410 : vector<8x128xf32> to vector<1x8x128xf32>
    tpu.vector_store %arg7[%411, %c0_105, %c0_106], %414 {strides = array<i32>} : memref<8x8x128xf32, #tpu.memory_space<vmem>>, vector<1x8x128xf32>,
    %415 = vector.broadcast %408 : vector<8x1xf32> to vector<8x128xf32>
    %416 = arith.mulf %415, %403 : vector<8x128xf32>
    %cst_107 = arith.constant 1.000000e+00 : f32
    %417 = vector.broadcast %cst_107 : f32 to vector<8x1xf32>
    %418 = arith.subf %417, %408 : vector<8x1xf32>
    %419 = vector.broadcast %418 : vector<8x1xf32> to vector<8x128xf32>
    %420 = arith.mulf %419, %371 : vector<8x128xf32>
    %421 = arith.addf %416, %420 : vector<8x128xf32>
    %c0_108 = arith.constant 0 : index
    %c0_109 = arith.constant 0 : index
    %422 = vector.load %arg8[%c0_108, %c0_109] : memref<8x128xf32, #tpu.memory_space<vmem>>, vector<8x128xf32>
    tpu.vector_store %arg8[%c0_108, %c0_109], %421 {strides = array<i32>} : memref<8x128xf32, #tpu.memory_space<vmem>>, vector<8x128xf32>,
    %c8_i32_110 = arith.constant 8 : i32
    return
  }
  func.func @transform_0(%arg0: i32, %arg1: i32) -> (i32, i32) {
    %c0_i32 = arith.constant 0 : i32
    %c0_i32_0 = arith.constant 0 : i32
    return %arg0, %c0_i32 : i32, i32
  }
  func.func @transform_1(%arg0: i32, %arg1: i32) -> (i32, i32) {
    %c0_i32 = arith.constant 0 : i32
    %c0_i32_0 = arith.constant 0 : i32
    return %arg0, %c0_i32 : i32, i32
  }
  func.func @transform_2(%arg0: i32, %arg1: i32) -> (i32, i32) {
    %c0_i32 = arith.constant 0 : i32
    %c0_i32_0 = arith.constant 0 : i32
    %c0_i32_1 = arith.constant 0 : i32
    return %c0_i32, %c0_i32_0 : i32, i32
  }
  func.func @transform_3(%arg0: i32, %arg1: i32) -> (i32, i32) {
    %c0_i32 = arith.constant 0 : i32
    %c0_i32_0 = arith.constant 0 : i32
    %c0_i32_1 = arith.constant 0 : i32
    return %c0_i32, %c0_i32_0 : i32, i32
  }
  func.func @transform_4(%arg0: i32, %arg1: i32) -> (i32, i32, i32) {
    %c0_i32 = arith.constant 0 : i32
    %c0_i32_0 = arith.constant 0 : i32
    return %arg1, %arg0, %c0_i32 : i32, i32, i32
  }
  func.func @transform_5(%arg0: i32, %arg1: i32) -> (i32, i32, i32) {
    %c0_i32 = arith.constant 0 : i32
    %c0_i32_0 = arith.constant 0 : i32
    return %arg1, %arg0, %c0_i32 : i32, i32, i32
  }
  func.func @transform_6(%arg0: i32, %arg1: i32) -> (i32, i32) {
    %c0_i32 = arith.constant 0 : i32
    %c0_i32_0 = arith.constant 0 : i32
    return %arg0, %c0_i32 : i32, i32
  }
}

</mosaic_0001>

<llo_original>
// kernel: super_awesome_forward.1
$region0: #{super_awesome_forward.1}
  #allocation0 [shape = 'u32[]', space=smem, size = 0x4, offset = 0x4, fixed_abs, tag = 'smem constant byte address 0x4 - core index']
  #allocation1 [shape = 'u32[72,128]{1,0:T(1,128)}', space=vmem, size = 0x9000, scoped, tag = 'internal scratch']
  %s0 = inlined_call_operand.vmem [shape: f32[8,128], index: 0, kind: input, shape index: {}]
  %s1 = inlined_call_operand.vmem [shape: s32[8,1], index: 1, kind: input, shape index: {}]
  %s2 = inlined_call_operand.vmem [shape: f32[128,384], index: 2, kind: input, shape index: {}]
  %s3 = inlined_call_operand.vmem [shape: f32[1,384], index: 3, kind: input, shape index: {}]
  %s4 = inlined_call_operand.vmem [shape: f32[8,8,384], index: 4, kind: input, shape index: {}]
  %s5 = inlined_call_operand.vmem [shape: f32[8,8,128], index: 5, kind: output, shape index: {0}]
  %s6 = inlined_call_operand.vmem [shape: f32[8,128], index: 6, kind: output, shape index: {1}]
  %7 = xla_tuple %s5, %s6
  %s8 = sld [smem:[#allocation0]]
  $region42: #{super_awesome_forward.1} parent=0
    _
  %s10 = ssub.s32 1, %s8
  %s11 = scalar_select 0, %s10, %s8
  // Predicated region
  $region2: #{super_awesome_forward.1} parent=0 // pred_check
    _
  $region3: #{super_awesome_forward.1} parent=0 // pred_check_branch
    %13 = sbr.rel (0) target = $region5
  $region4: #{super_awesome_forward.1} parent=0 // pred_region
    _
  $region5: #{super_awesome_forward.1} parent=0 // pred_fallthru
    _
  // Predicated region
  $region6: #{super_awesome_forward.1} parent=0 // pred_check
    _
  $region7: #{super_awesome_forward.1} parent=0 // pred_check_branch
    %15 = sbr.rel (0) target = $region9
  $region8: #{super_awesome_forward.1} parent=0 // pred_region
    _
  $region9: #{super_awesome_forward.1} parent=0 // pred_fallthru
    _
  // Predicated region
  $region10: #{super_awesome_forward.1} parent=0 // pred_check
    _
  $region11: #{super_awesome_forward.1} parent=0 // pred_check_branch
    %17 = sbr.rel (0) target = $region13
  $region12: #{super_awesome_forward.1} parent=0 // pred_region
    _
  $region13: #{super_awesome_forward.1} parent=0 // pred_fallthru
    _
  // Predicated region
  $region14: #{super_awesome_forward.1} parent=0 // pred_check
    _
  $region15: #{super_awesome_forward.1} parent=0 // pred_check_branch
    %19 = sbr.rel (0) target = $region17
  $region16: #{super_awesome_forward.1} parent=0 // pred_region
    _
  $region17: #{super_awesome_forward.1} parent=0 // pred_fallthru
    _
  // Predicated region
  $region18: #{super_awesome_forward.1} parent=0 // pred_check
    _
  $region19: #{super_awesome_forward.1} parent=0 // pred_check_branch
    %21 = sbr.rel (0) target = $region21
  $region20: #{super_awesome_forward.1} parent=0 // pred_region
    _
  $region21: #{super_awesome_forward.1} parent=0 // pred_fallthru
    _
  %p22 = scmp.eq.s32.totalorder 0, 0
  // Predicated region
  $region22: #{super_awesome_forward.1} parent=0 // pred_check
    %p23 = pneg %p22
  $region23: #{super_awesome_forward.1} parent=0 // pred_check_branch
    %25 = sbr.rel (%p23) target = $region25
  $region24: #{super_awesome_forward.1} parent=0 // pred_region
    %v26 = vld [vmem:[%s0] sm:$0xff]
    %27 = vst [vmem:[%s6] sm:$0xff] %v26
  $region25: #{super_awesome_forward.1} parent=0 // pred_fallthru
    _
  %v28 = vld [vmem:[%s2] sm:$0xff]
  %v29 = vld [vmem:[%s2 + $0x8] sm:$0xff]
  %v30 = vld [vmem:[%s2 + $0x10] sm:$0xff]
  %v31 = vld [vmem:[%s2 + $0x18] sm:$0xff]
  %v32 = vld [vmem:[%s2 + $0x20] sm:$0xff]
  %v33 = vld [vmem:[%s2 + $0x28] sm:$0xff]
  %v34 = vld [vmem:[%s2 + $0x30] sm:$0xff]
  %v35 = vld [vmem:[%s2 + $0x38] sm:$0xff]
  %v36 = vld [vmem:[%s2 + $0x40] sm:$0xff]
  %v37 = vld [vmem:[%s2 + $0x48] sm:$0xff]
  %v38 = vld [vmem:[%s2 + $0x50] sm:$0xff]
  %v39 = vld [vmem:[%s2 + $0x58] sm:$0xff]
  %v40 = vld [vmem:[%s2 + $0x60] sm:$0xff]
  %v41 = vld [vmem:[%s2 + $0x68] sm:$0xff]
  %v42 = vld [vmem:[%s2 + $0x70] sm:$0xff]
  %v43 = vld [vmem:[%s2 + $0x78] sm:$0xff]
  %v44 = vld [vmem:[%s2 + $0x80] sm:$0xff]
  %v45 = vld [vmem:[%s2 + $0x88] sm:$0xff]
  %v46 = vld [vmem:[%s2 + $0x90] sm:$0xff]
  %v47 = vld [vmem:[%s2 + $0x98] sm:$0xff]
  %v48 = vld [vmem:[%s2 + $0xa0] sm:$0xff]
  %v49 = vld [vmem:[%s2 + $0xa8] sm:$0xff]
  %v50 = vld [vmem:[%s2 + $0xb0] sm:$0xff]
  %v51 = vld [vmem:[%s2 + $0xb8] sm:$0xff]
  %v52 = vld [vmem:[%s2 + $0xc0] sm:$0xff]
  %v53 = vld [vmem:[%s2 + $0xc8] sm:$0xff]
  %v54 = vld [vmem:[%s2 + $0xd0] sm:$0xff]
  %v55 = vld [vmem:[%s2 + $0xd8] sm:$0xff]
  %v56 = vld [vmem:[%s2 + $0xe0] sm:$0xff]
  %v57 = vld [vmem:[%s2 + $0xe8] sm:$0xff]
  %v58 = vld [vmem:[%s2 + $0xf0] sm:$0xff]
  %v59 = vld [vmem:[%s2 + $0xf8] sm:$0xff]
  %v60 = vld [vmem:[%s2 + $0x100] sm:$0xff]
  %v61 = vld [vmem:[%s2 + $0x108] sm:$0xff]
  %v62 = vld [vmem:[%s2 + $0x110] sm:$0xff]
  %v63 = vld [vmem:[%s2 + $0x118] sm:$0xff]
  %v64 = vld [vmem:[%s2 + $0x120] sm:$0xff]
  %v65 = vld [vmem:[%s2 + $0x128] sm:$0xff]
  %v66 = vld [vmem:[%s2 + $0x130] sm:$0xff]
  %v67 = vld [vmem:[%s2 + $0x138] sm:$0xff]
  %v68 = vld [vmem:[%s2 + $0x140] sm:$0xff]
  %v69 = vld [vmem:[%s2 + $0x148] sm:$0xff]
  %v70 = vld [vmem:[%s2 + $0x150] sm:$0xff]
  %v71 = vld [vmem:[%s2 + $0x158] sm:$0xff]
  %v72 = vld [vmem:[%s2 + $0x160] sm:$0xff]
  %v73 = vld [vmem:[%s2 + $0x168] sm:$0xff]
  %v74 = vld [vmem:[%s2 + $0x170] sm:$0xff]
  %v75 = vld [vmem:[%s2 + $0x178] sm:$0xff]
  %v76 = vld [vmem:[%s3] sm:$0x7]
  %v77 = vld [vmem:[%s1] sm:$0xff]
  %s78 = smul.u32 0, 8
  %v79 = vld [vmem:[%s6] sm:$0xff]
  %v80 = vld [vmem:[%s4] sm:$0xff]
  %v81 = vld [vmem:[%s4 + $0x8] sm:$0xff]
  %v82 = vld [vmem:[%s4 + $0x10] sm:$0xff]
  %v84 = vperm.slane %v76, 0
  %v85 = vperm.slane %v76, 1
  %v86 = vperm.slane %v76, 2
  %90 = vmatpush.msra.mxu0 %v73
  %91 = vmatpush.msra.mxu0 %v70
  %92 = vmatpush.msra.mxu0 %v67
  %93 = vmatpush.msra.mxu0 %v64
  %94 = vmatpush.msra.mxu0 %v61
  %95 = vmatpush.msra.mxu0 %v58
  %96 = vmatpush.msra.mxu0 %v55
  %97 = vmatpush.msra.mxu0 %v52
  %98 = vmatpush.msra.mxu0 %v49
  %99 = vmatpush.msra.mxu0 %v46
  %100 = vmatpush.msra.mxu0 %v43
  %101 = vmatpush.msra.mxu0 %v40
  %102 = vmatpush.msra.mxu0 %v37
  %103 = vmatpush.msra.mxu0 %v34
  %104 = vmatpush.msra.mxu0 %v31
  %105 = vmatpush.msra.mxu0 %v28
  %106 = vmatmul.f32.gmra.mxu0 %v79
  %v107 = vpop.f32.mrf.mxu0
  %v108 = vadd.f32 %v84, %v107
  %109 = vdwg.mxu0
  %110 = vmatpush.msra.mxu0 %v74
  %111 = vmatpush.msra.mxu0 %v71
  %112 = vmatpush.msra.mxu0 %v68
  %113 = vmatpush.msra.mxu0 %v65
  %114 = vmatpush.msra.mxu0 %v62
  %115 = vmatpush.msra.mxu0 %v59
  %116 = vmatpush.msra.mxu0 %v56
  %117 = vmatpush.msra.mxu0 %v53
  %118 = vmatpush.msra.mxu0 %v50
  %119 = vmatpush.msra.mxu0 %v47
  %120 = vmatpush.msra.mxu0 %v44
  %121 = vmatpush.msra.mxu0 %v41
  %122 = vmatpush.msra.mxu0 %v38
  %123 = vmatpush.msra.mxu0 %v35
  %124 = vmatpush.msra.mxu0 %v32
  %125 = vmatpush.msra.mxu0 %v29
  %126 = vmatmul.f32.gmra.mxu0 %v79
  %v127 = vpop.f32.mrf.mxu0
  %v128 = vadd.f32 %v85, %v127
  %129 = vdwg.mxu0
  %130 = vmatpush.msra.mxu0 %v75
  %131 = vmatpush.msra.mxu0 %v72
  %132 = vmatpush.msra.mxu0 %v69
  %133 = vmatpush.msra.mxu0 %v66
  %134 = vmatpush.msra.mxu0 %v63
  %135 = vmatpush.msra.mxu0 %v60
  %136 = vmatpush.msra.mxu0 %v57
  %137 = vmatpush.msra.mxu0 %v54
  %138 = vmatpush.msra.mxu0 %v51
  %139 = vmatpush.msra.mxu0 %v48
  %140 = vmatpush.msra.mxu0 %v45
  %141 = vmatpush.msra.mxu0 %v42
  %142 = vmatpush.msra.mxu0 %v39
  %143 = vmatpush.msra.mxu0 %v36
  %144 = vmatpush.msra.mxu0 %v33
  %145 = vmatpush.msra.mxu0 %v30
  %146 = vmatmul.f32.gmra.mxu0 %v79
  %v147 = vpop.f32.mrf.mxu0
  %v148 = vadd.f32 %v86, %v147
  %149 = vdwg.mxu0
  %v150 = vadd.f32 %v80, %v108
  %v151 = vxor.u32 %v150, 2147483648
  %v152 = vmul.f32 %v151, 1.442695
  %v153 = vpow.pop %v152
  %v154 = vadd.f32 %v153, 1.0
  %v155 = vrcp.pop %v154
  %v156 = vmul.f32 %v154, %v155
  %v157 = vsub.f32 1.0, %v156
  %v158 = vmul.f32 %v155, %v157
  %v159 = vadd.f32 %v155, %v158
  %vm160 = vweird.f32 %v154
  %vm161 = vweird.f32 %v155
  %vm162 = vmor %vm160, %vm161
  %v163 = vsel %vm162, %v155, %v159
  %v164 = vand.u32 2147483647, %v154
  %vm165 = vcmp.eq.f32.partialorder %v164, 8.507059e+37
  %v166 = vand.u32 %v154, 2147483648
  %v167 = vor.u32 1.1754944e-38, %v166
  %v168 = vsel %vm165, %v167, %v163
  %v169 = vmul.f32 1.0, %v168
  %v170 = vadd.f32 %v81, %v128
  %v171 = vxor.u32 %v170, 2147483648
  %v172 = vmul.f32 %v171, 1.442695
  %v173 = vpow.pop %v172
  %v174 = vadd.f32 %v173, 1.0
  %v175 = vrcp.pop %v174
  %v176 = vmul.f32 %v174, %v175
  %v177 = vsub.f32 1.0, %v176
  %v178 = vmul.f32 %v175, %v177
  %v179 = vadd.f32 %v175, %v178
  %vm180 = vweird.f32 %v174
  %vm181 = vweird.f32 %v175
  %vm182 = vmor %vm180, %vm181
  %v183 = vsel %vm182, %v175, %v179
  %v184 = vand.u32 2147483647, %v174
  %vm185 = vcmp.eq.f32.partialorder %v184, 8.507059e+37
  %v186 = vand.u32 %v174, 2147483648
  %v187 = vor.u32 1.1754944e-38, %v186
  %v188 = vsel %vm185, %v187, %v183
  %v189 = vmul.f32 1.0, %v188
  %v190 = vmul.f32 %v169, %v148
  %v191 = vadd.f32 %v82, %v190
  %v192 = vtanh.pop %v191
  %v193 = vsub.f32 1.0, %v189
  %v194 = vmul.f32 %v193, %v192
  %v195 = vmul.f32 %v189, %v79
  %v196 = vadd.f32 %v194, %v195
  %v197 = vstv %s78
  %vm198 = vcmp.gt.s32.totalorder %v77, %v197
  %v199 = vsel %vm198, 1, 0
  %v200 = vcvt.s32.f32 %v199
  %202 = vset.pattern.permute.xlu0 0
  %203 = vperm.xlu0 %202, %v200
  %v204 = vpop.permute.xlu0 %203
  %v206 = vmul.f32 %v204, %v196
  %207 = vst [vmem:[%s5] sm:$0xff] %v206
  %v208 = vsub.f32 1.0, %v200
  %210 = vset.pattern.permute.xlu0 0
  %211 = vperm.xlu0 %210, %v208
  %v212 = vpop.permute.xlu0 %211
  %v214 = vmul.f32 %v212, %v79
  %v215 = vadd.f32 %v206, %v214
  %216 = vst [vmem:[%s6] sm:$0xff] %v215
  %v217 = vld [vmem:[%s6] sm:$0xff]
  %s218 = scalar_lea.vmem %s4, 24
  %v219 = vld [vmem:[%s218] sm:$0xff]
  %v220 = vld [vmem:[%s218 + $0x8] sm:$0xff]
  %v221 = vld [vmem:[%s218 + $0x10] sm:$0xff]
  %222 = vmatpush.msra.mxu0 %v73
  %223 = vmatpush.msra.mxu0 %v70
  %224 = vmatpush.msra.mxu0 %v67
  %225 = vmatpush.msra.mxu0 %v64
  %226 = vmatpush.msra.mxu0 %v61
  %227 = vmatpush.msra.mxu0 %v58
  %228 = vmatpush.msra.mxu0 %v55
  %229 = vmatpush.msra.mxu0 %v52
  %230 = vmatpush.msra.mxu0 %v49
  %231 = vmatpush.msra.mxu0 %v46
  %232 = vmatpush.msra.mxu0 %v43
  %233 = vmatpush.msra.mxu0 %v40
  %234 = vmatpush.msra.mxu0 %v37
  %235 = vmatpush.msra.mxu0 %v34
  %236 = vmatpush.msra.mxu0 %v31
  %237 = vmatpush.msra.mxu0 %v28
  %238 = vmatmul.f32.gmra.mxu0 %v217
  %v239 = vpop.f32.mrf.mxu0
  %v240 = vadd.f32 %v84, %v239
  %241 = vdwg.mxu0
  %242 = vmatpush.msra.mxu0 %v74
  %243 = vmatpush.msra.mxu0 %v71
  %244 = vmatpush.msra.mxu0 %v68
  %245 = vmatpush.msra.mxu0 %v65
  %246 = vmatpush.msra.mxu0 %v62
  %247 = vmatpush.msra.mxu0 %v59
  %248 = vmatpush.msra.mxu0 %v56
  %249 = vmatpush.msra.mxu0 %v53
  %250 = vmatpush.msra.mxu0 %v50
  %251 = vmatpush.msra.mxu0 %v47
  %252 = vmatpush.msra.mxu0 %v44
  %253 = vmatpush.msra.mxu0 %v41
  %254 = vmatpush.msra.mxu0 %v38
  %255 = vmatpush.msra.mxu0 %v35
  %256 = vmatpush.msra.mxu0 %v32
  %257 = vmatpush.msra.mxu0 %v29
  %258 = vmatmul.f32.gmra.mxu0 %v217
  %v259 = vpop.f32.mrf.mxu0
  %v260 = vadd.f32 %v85, %v259
  %261 = vdwg.mxu0
  %262 = vmatpush.msra.mxu0 %v75
  %263 = vmatpush.msra.mxu0 %v72
  %264 = vmatpush.msra.mxu0 %v69
  %265 = vmatpush.msra.mxu0 %v66
  %266 = vmatpush.msra.mxu0 %v63
  %267 = vmatpush.msra.mxu0 %v60
  %268 = vmatpush.msra.mxu0 %v57
  %269 = vmatpush.msra.mxu0 %v54
  %270 = vmatpush.msra.mxu0 %v51
  %271 = vmatpush.msra.mxu0 %v48
  %272 = vmatpush.msra.mxu0 %v45
  %273 = vmatpush.msra.mxu0 %v42
  %274 = vmatpush.msra.mxu0 %v39
  %275 = vmatpush.msra.mxu0 %v36
  %276 = vmatpush.msra.mxu0 %v33
  %277 = vmatpush.msra.mxu0 %v30
  %278 = vmatmul.f32.gmra.mxu0 %v217
  %v279 = vpop.f32.mrf.mxu0
  %v280 = vadd.f32 %v86, %v279
  %281 = vdwg.mxu0
  %v282 = vadd.f32 %v219, %v240
  %v283 = vxor.u32 %v282, 2147483648
  %v284 = vmul.f32 %v283, 1.442695
  %v285 = vpow.pop %v284
  %v286 = vadd.f32 %v285, 1.0
  %v287 = vrcp.pop %v286
  %v288 = vmul.f32 %v286, %v287
  %v289 = vsub.f32 1.0, %v288
  %v290 = vmul.f32 %v287, %v289
  %v291 = vadd.f32 %v287, %v290
  %vm292 = vweird.f32 %v286
  %vm293 = vweird.f32 %v287
  %vm294 = vmor %vm292, %vm293
  %v295 = vsel %vm294, %v287, %v291
  %v296 = vand.u32 2147483647, %v286
  %vm297 = vcmp.eq.f32.partialorder %v296, 8.507059e+37
  %v298 = vand.u32 %v286, 2147483648
  %v299 = vor.u32 1.1754944e-38, %v298
  %v300 = vsel %vm297, %v299, %v295
  %v301 = vmul.f32 1.0, %v300
  %v302 = vadd.f32 %v220, %v260
  %v303 = vxor.u32 %v302, 2147483648
  %v304 = vmul.f32 %v303, 1.442695
  %v305 = vpow.pop %v304
  %v306 = vadd.f32 %v305, 1.0
  %v307 = vrcp.pop %v306
  %v308 = vmul.f32 %v306, %v307
  %v309 = vsub.f32 1.0, %v308
  %v310 = vmul.f32 %v307, %v309
  %v311 = vadd.f32 %v307, %v310
  %vm312 = vweird.f32 %v306
  %vm313 = vweird.f32 %v307
  %vm314 = vmor %vm312, %vm313
  %v315 = vsel %vm314, %v307, %v311
  %v316 = vand.u32 2147483647, %v306
  %vm317 = vcmp.eq.f32.partialorder %v316, 8.507059e+37
  %v318 = vand.u32 %v306, 2147483648
  %v319 = vor.u32 1.1754944e-38, %v318
  %v320 = vsel %vm317, %v319, %v315
  %v321 = vmul.f32 1.0, %v320
  %v322 = vmul.f32 %v301, %v280
  %v323 = vadd.f32 %v221, %v322
  %v324 = vtanh.pop %v323
  %v325 = vsub.f32 1.0, %v321
  %v326 = vmul.f32 %v325, %v324
  %v327 = vmul.f32 %v321, %v217
  %v328 = vadd.f32 %v326, %v327
  %s329 = sadd.s32 %s78, 1
  %v330 = vstv %s329
  %vm331 = vcmp.gt.s32.totalorder %v77, %v330
  %v332 = vsel %vm331, 1, 0
  %v333 = vcvt.s32.f32 %v332
  %335 = vset.pattern.permute.xlu0 0
  %336 = vperm.xlu0 %335, %v333
  %v337 = vpop.permute.xlu0 %336
  %v339 = vmul.f32 %v337, %v328
  %s340 = scalar_lea.vmem %s5, 8
  %341 = vst [vmem:[%s340] sm:$0xff] %v339
  %v342 = vsub.f32 1.0, %v333
  %344 = vset.pattern.permute.xlu0 0
  %345 = vperm.xlu0 %344, %v342
  %v346 = vpop.permute.xlu0 %345
  %v348 = vmul.f32 %v346, %v217
  %v349 = vadd.f32 %v339, %v348
  %350 = vst [vmem:[%s6] sm:$0xff] %v349
  %v351 = vld [vmem:[%s6] sm:$0xff]
  %s352 = scalar_lea.vmem %s4, 48
  %v353 = vld [vmem:[%s352] sm:$0xff]
  %v354 = vld [vmem:[%s352 + $0x8] sm:$0xff]
  %v355 = vld [vmem:[%s352 + $0x10] sm:$0xff]
  %356 = vmatpush.msra.mxu0 %v73
  %357 = vmatpush.msra.mxu0 %v70
  %358 = vmatpush.msra.mxu0 %v67
  %359 = vmatpush.msra.mxu0 %v64
  %360 = vmatpush.msra.mxu0 %v61
  %361 = vmatpush.msra.mxu0 %v58
  %362 = vmatpush.msra.mxu0 %v55
  %363 = vmatpush.msra.mxu0 %v52
  %364 = vmatpush.msra.mxu0 %v49
  %365 = vmatpush.msra.mxu0 %v46
  %366 = vmatpush.msra.mxu0 %v43
  %367 = vmatpush.msra.mxu0 %v40
  %368 = vmatpush.msra.mxu0 %v37
  %369 = vmatpush.msra.mxu0 %v34
  %370 = vmatpush.msra.mxu0 %v31
  %371 = vmatpush.msra.mxu0 %v28
  %372 = vmatmul.f32.gmra.mxu0 %v351
  %v373 = vpop.f32.mrf.mxu0
  %v374 = vadd.f32 %v84, %v373
  %375 = vdwg.mxu0
  %376 = vmatpush.msra.mxu0 %v74
  %377 = vmatpush.msra.mxu0 %v71
  %378 = vmatpush.msra.mxu0 %v68
  %379 = vmatpush.msra.mxu0 %v65
  %380 = vmatpush.msra.mxu0 %v62
  %381 = vmatpush.msra.mxu0 %v59
  %382 = vmatpush.msra.mxu0 %v56
  %383 = vmatpush.msra.mxu0 %v53
  %384 = vmatpush.msra.mxu0 %v50
  %385 = vmatpush.msra.mxu0 %v47
  %386 = vmatpush.msra.mxu0 %v44
  %387 = vmatpush.msra.mxu0 %v41
  %388 = vmatpush.msra.mxu0 %v38
  %389 = vmatpush.msra.mxu0 %v35
  %390 = vmatpush.msra.mxu0 %v32
  %391 = vmatpush.msra.mxu0 %v29
  %392 = vmatmul.f32.gmra.mxu0 %v351
  %v393 = vpop.f32.mrf.mxu0
  %v394 = vadd.f32 %v85, %v393
  %395 = vdwg.mxu0
  %396 = vmatpush.msra.mxu0 %v75
  %397 = vmatpush.msra.mxu0 %v72
  %398 = vmatpush.msra.mxu0 %v69
  %399 = vmatpush.msra.mxu0 %v66
  %400 = vmatpush.msra.mxu0 %v63
  %401 = vmatpush.msra.mxu0 %v60
  %402 = vmatpush.msra.mxu0 %v57
  %403 = vmatpush.msra.mxu0 %v54
  %404 = vmatpush.msra.mxu0 %v51
  %405 = vmatpush.msra.mxu0 %v48
  %406 = vmatpush.msra.mxu0 %v45
  %407 = vmatpush.msra.mxu0 %v42
  %408 = vmatpush.msra.mxu0 %v39
  %409 = vmatpush.msra.mxu0 %v36
  %410 = vmatpush.msra.mxu0 %v33
  %411 = vmatpush.msra.mxu0 %v30
  %412 = vmatmul.f32.gmra.mxu0 %v351
  %v413 = vpop.f32.mrf.mxu0
  %v414 = vadd.f32 %v86, %v413
  %415 = vdwg.mxu0
  %v416 = vadd.f32 %v353, %v374
  %v417 = vxor.u32 %v416, 2147483648
  %v418 = vmul.f32 %v417, 1.442695
  %v419 = vpow.pop %v418
  %v420 = vadd.f32 %v419, 1.0
  %v421 = vrcp.pop %v420
  %v422 = vmul.f32 %v420, %v421
  %v423 = vsub.f32 1.0, %v422
  %v424 = vmul.f32 %v421, %v423
  %v425 = vadd.f32 %v421, %v424
  %vm426 = vweird.f32 %v420
  %vm427 = vweird.f32 %v421
  %vm428 = vmor %vm426, %vm427
  %v429 = vsel %vm428, %v421, %v425
  %v430 = vand.u32 2147483647, %v420
  %vm431 = vcmp.eq.f32.partialorder %v430, 8.507059e+37
  %v432 = vand.u32 %v420, 2147483648
  %v433 = vor.u32 1.1754944e-38, %v432
  %v434 = vsel %vm431, %v433, %v429
  %v435 = vmul.f32 1.0, %v434
  %v436 = vadd.f32 %v354, %v394
  %v437 = vxor.u32 %v436, 2147483648
  %v438 = vmul.f32 %v437, 1.442695
  %v439 = vpow.pop %v438
  %v440 = vadd.f32 %v439, 1.0
  %v441 = vrcp.pop %v440
  %v442 = vmul.f32 %v440, %v441
  %v443 = vsub.f32 1.0, %v442
  %v444 = vmul.f32 %v441, %v443
  %v445 = vadd.f32 %v441, %v444
  %vm446 = vweird.f32 %v440
  %vm447 = vweird.f32 %v441
  %vm448 = vmor %vm446, %vm447
  %v449 = vsel %vm448, %v441, %v445
  %v450 = vand.u32 2147483647, %v440
  %vm451 = vcmp.eq.f32.partialorder %v450, 8.507059e+37
  %v452 = vand.u32 %v440, 2147483648
  %v453 = vor.u32 1.1754944e-38, %v452
  %v454 = vsel %vm451, %v453, %v449
  %v455 = vmul.f32 1.0, %v454
  %v456 = vmul.f32 %v435, %v414
  %v457 = vadd.f32 %v355, %v456
  %v458 = vtanh.pop %v457
  %v459 = vsub.f32 1.0, %v455
  %v460 = vmul.f32 %v459, %v458
  %v461 = vmul.f32 %v455, %v351
  %v462 = vadd.f32 %v460, %v461
  %s463 = sadd.s32 %s78, 2
  %v464 = vstv %s463
  %vm465 = vcmp.gt.s32.totalorder %v77, %v464
  %v466 = vsel %vm465, 1, 0
  %v467 = vcvt.s32.f32 %v466
  %469 = vset.pattern.permute.xlu0 0
  %470 = vperm.xlu0 %469, %v467
  %v471 = vpop.permute.xlu0 %470
  %v473 = vmul.f32 %v471, %v462
  %s474 = scalar_lea.vmem %s5, 16
  %475 = vst [vmem:[%s474] sm:$0xff] %v473
  %v476 = vsub.f32 1.0, %v467
  %478 = vset.pattern.permute.xlu0 0
  %479 = vperm.xlu0 %478, %v476
  %v480 = vpop.permute.xlu0 %479
  %v482 = vmul.f32 %v480, %v351
  %v483 = vadd.f32 %v473, %v482
  %484 = vst [vmem:[%s6] sm:$0xff] %v483
  %v485 = vld [vmem:[%s6] sm:$0xff]
  %s486 = scalar_lea.vmem %s4, 72
  %v487 = vld [vmem:[%s486] sm:$0xff]
  %v488 = vld [vmem:[%s486 + $0x8] sm:$0xff]
  %v489 = vld [vmem:[%s486 + $0x10] sm:$0xff]
  %490 = vmatpush.msra.mxu0 %v73
  %491 = vmatpush.msra.mxu0 %v70
  %492 = vmatpush.msra.mxu0 %v67
  %493 = vmatpush.msra.mxu0 %v64
  %494 = vmatpush.msra.mxu0 %v61
  %495 = vmatpush.msra.mxu0 %v58
  %496 = vmatpush.msra.mxu0 %v55
  %497 = vmatpush.msra.mxu0 %v52
  %498 = vmatpush.msra.mxu0 %v49
  %499 = vmatpush.msra.mxu0 %v46
  %500 = vmatpush.msra.mxu0 %v43
  %501 = vmatpush.msra.mxu0 %v40
  %502 = vmatpush.msra.mxu0 %v37
  %503 = vmatpush.msra.mxu0 %v34
  %504 = vmatpush.msra.mxu0 %v31
  %505 = vmatpush.msra.mxu0 %v28
  %506 = vmatmul.f32.gmra.mxu0 %v485
  %v507 = vpop.f32.mrf.mxu0
  %v508 = vadd.f32 %v84, %v507
  %509 = vdwg.mxu0
  %510 = vmatpush.msra.mxu0 %v74
  %511 = vmatpush.msra.mxu0 %v71
  %512 = vmatpush.msra.mxu0 %v68
  %513 = vmatpush.msra.mxu0 %v65
  %514 = vmatpush.msra.mxu0 %v62
  %515 = vmatpush.msra.mxu0 %v59
  %516 = vmatpush.msra.mxu0 %v56
  %517 = vmatpush.msra.mxu0 %v53
  %518 = vmatpush.msra.mxu0 %v50
  %519 = vmatpush.msra.mxu0 %v47
  %520 = vmatpush.msra.mxu0 %v44
  %521 = vmatpush.msra.mxu0 %v41
  %522 = vmatpush.msra.mxu0 %v38
  %523 = vmatpush.msra.mxu0 %v35
  %524 = vmatpush.msra.mxu0 %v32
  %525 = vmatpush.msra.mxu0 %v29
  %526 = vmatmul.f32.gmra.mxu0 %v485
  %v527 = vpop.f32.mrf.mxu0
  %v528 = vadd.f32 %v85, %v527
  %529 = vdwg.mxu0
  %530 = vmatpush.msra.mxu0 %v75
  %531 = vmatpush.msra.mxu0 %v72
  %532 = vmatpush.msra.mxu0 %v69
  %533 = vmatpush.msra.mxu0 %v66
  %534 = vmatpush.msra.mxu0 %v63
  %535 = vmatpush.msra.mxu0 %v60
  %536 = vmatpush.msra.mxu0 %v57
  %537 = vmatpush.msra.mxu0 %v54
  %538 = vmatpush.msra.mxu0 %v51
  %539 = vmatpush.msra.mxu0 %v48
  %540 = vmatpush.msra.mxu0 %v45
  %541 = vmatpush.msra.mxu0 %v42
  %542 = vmatpush.msra.mxu0 %v39
  %543 = vmatpush.msra.mxu0 %v36
  %544 = vmatpush.msra.mxu0 %v33
  %545 = vmatpush.msra.mxu0 %v30
  %546 = vmatmul.f32.gmra.mxu0 %v485
  %v547 = vpop.f32.mrf.mxu0
  %v548 = vadd.f32 %v86, %v547
  %549 = vdwg.mxu0
  %v550 = vadd.f32 %v487, %v508
  %v551 = vxor.u32 %v550, 2147483648
  %v552 = vmul.f32 %v551, 1.442695
  %v553 = vpow.pop %v552
  %v554 = vadd.f32 %v553, 1.0
  %v555 = vrcp.pop %v554
  %v556 = vmul.f32 %v554, %v555
  %v557 = vsub.f32 1.0, %v556
  %v558 = vmul.f32 %v555, %v557
  %v559 = vadd.f32 %v555, %v558
  %vm560 = vweird.f32 %v554
  %vm561 = vweird.f32 %v555
  %vm562 = vmor %vm560, %vm561
  %v563 = vsel %vm562, %v555, %v559
  %v564 = vand.u32 2147483647, %v554
  %vm565 = vcmp.eq.f32.partialorder %v564, 8.507059e+37
  %v566 = vand.u32 %v554, 2147483648
  %v567 = vor.u32 1.1754944e-38, %v566
  %v568 = vsel %vm565, %v567, %v563
  %v569 = vmul.f32 1.0, %v568
  %v570 = vadd.f32 %v488, %v528
  %v571 = vxor.u32 %v570, 2147483648
  %v572 = vmul.f32 %v571, 1.442695
  %v573 = vpow.pop %v572
  %v574 = vadd.f32 %v573, 1.0
  %v575 = vrcp.pop %v574
  %v576 = vmul.f32 %v574, %v575
  %v577 = vsub.f32 1.0, %v576
  %v578 = vmul.f32 %v575, %v577
  %v579 = vadd.f32 %v575, %v578
  %vm580 = vweird.f32 %v574
  %vm581 = vweird.f32 %v575
  %vm582 = vmor %vm580, %vm581
  %v583 = vsel %vm582, %v575, %v579
  %v584 = vand.u32 2147483647, %v574
  %vm585 = vcmp.eq.f32.partialorder %v584, 8.507059e+37
  %v586 = vand.u32 %v574, 2147483648
  %v587 = vor.u32 1.1754944e-38, %v586
  %v588 = vsel %vm585, %v587, %v583
  %v589 = vmul.f32 1.0, %v588
  %v590 = vmul.f32 %v569, %v548
  %v591 = vadd.f32 %v489, %v590
  %v592 = vtanh.pop %v591
  %v593 = vsub.f32 1.0, %v589
  %v594 = vmul.f32 %v593, %v592
  %v595 = vmul.f32 %v589, %v485
  %v596 = vadd.f32 %v594, %v595
  %s597 = sadd.s32 %s78, 3
  %v598 = vstv %s597
  %vm599 = vcmp.gt.s32.totalorder %v77, %v598
  %v600 = vsel %vm599, 1, 0
  %v601 = vcvt.s32.f32 %v600
  %603 = vset.pattern.permute.xlu0 0
  %604 = vperm.xlu0 %603, %v601
  %v605 = vpop.permute.xlu0 %604
  %v607 = vmul.f32 %v605, %v596
  %s608 = scalar_lea.vmem %s5, 24
  %609 = vst [vmem:[%s608] sm:$0xff] %v607
  %v610 = vsub.f32 1.0, %v601
  %612 = vset.pattern.permute.xlu0 0
  %613 = vperm.xlu0 %612, %v610
  %v614 = vpop.permute.xlu0 %613
  %v616 = vmul.f32 %v614, %v485
  %v617 = vadd.f32 %v607, %v616
  %618 = vst [vmem:[%s6] sm:$0xff] %v617
  %v619 = vld [vmem:[%s6] sm:$0xff]
  %s620 = scalar_lea.vmem %s4, 96
  %v621 = vld [vmem:[%s620] sm:$0xff]
  %v622 = vld [vmem:[%s620 + $0x8] sm:$0xff]
  %v623 = vld [vmem:[%s620 + $0x10] sm:$0xff]
  %624 = vmatpush.msra.mxu0 %v73
  %625 = vmatpush.msra.mxu0 %v70
  %626 = vmatpush.msra.mxu0 %v67
  %627 = vmatpush.msra.mxu0 %v64
  %628 = vmatpush.msra.mxu0 %v61
  %629 = vmatpush.msra.mxu0 %v58
  %630 = vmatpush.msra.mxu0 %v55
  %631 = vmatpush.msra.mxu0 %v52
  %632 = vmatpush.msra.mxu0 %v49
  %633 = vmatpush.msra.mxu0 %v46
  %634 = vmatpush.msra.mxu0 %v43
  %635 = vmatpush.msra.mxu0 %v40
  %636 = vmatpush.msra.mxu0 %v37
  %637 = vmatpush.msra.mxu0 %v34
  %638 = vmatpush.msra.mxu0 %v31
  %639 = vmatpush.msra.mxu0 %v28
  %640 = vmatmul.f32.gmra.mxu0 %v619
  %v641 = vpop.f32.mrf.mxu0
  %v642 = vadd.f32 %v84, %v641
  %643 = vdwg.mxu0
  %644 = vmatpush.msra.mxu0 %v74
  %645 = vmatpush.msra.mxu0 %v71
  %646 = vmatpush.msra.mxu0 %v68
  %647 = vmatpush.msra.mxu0 %v65
  %648 = vmatpush.msra.mxu0 %v62
  %649 = vmatpush.msra.mxu0 %v59
  %650 = vmatpush.msra.mxu0 %v56
  %651 = vmatpush.msra.mxu0 %v53
  %652 = vmatpush.msra.mxu0 %v50
  %653 = vmatpush.msra.mxu0 %v47
  %654 = vmatpush.msra.mxu0 %v44
  %655 = vmatpush.msra.mxu0 %v41
  %656 = vmatpush.msra.mxu0 %v38
  %657 = vmatpush.msra.mxu0 %v35
  %658 = vmatpush.msra.mxu0 %v32
  %659 = vmatpush.msra.mxu0 %v29
  %660 = vmatmul.f32.gmra.mxu0 %v619
  %v661 = vpop.f32.mrf.mxu0
  %v662 = vadd.f32 %v85, %v661
  %663 = vdwg.mxu0
  %664 = vmatpush.msra.mxu0 %v75
  %665 = vmatpush.msra.mxu0 %v72
  %666 = vmatpush.msra.mxu0 %v69
  %667 = vmatpush.msra.mxu0 %v66
  %668 = vmatpush.msra.mxu0 %v63
  %669 = vmatpush.msra.mxu0 %v60
  %670 = vmatpush.msra.mxu0 %v57
  %671 = vmatpush.msra.mxu0 %v54
  %672 = vmatpush.msra.mxu0 %v51
  %673 = vmatpush.msra.mxu0 %v48
  %674 = vmatpush.msra.mxu0 %v45
  %675 = vmatpush.msra.mxu0 %v42
  %676 = vmatpush.msra.mxu0 %v39
  %677 = vmatpush.msra.mxu0 %v36
  %678 = vmatpush.msra.mxu0 %v33
  %679 = vmatpush.msra.mxu0 %v30
  %680 = vmatmul.f32.gmra.mxu0 %v619
  %v681 = vpop.f32.mrf.mxu0
  %v682 = vadd.f32 %v86, %v681
  %683 = vdwg.mxu0
  %v684 = vadd.f32 %v621, %v642
  %v685 = vxor.u32 %v684, 2147483648
  %v686 = vmul.f32 %v685, 1.442695
  %v687 = vpow.pop %v686
  %v688 = vadd.f32 %v687, 1.0
  %v689 = vrcp.pop %v688
  %v690 = vmul.f32 %v688, %v689
  %v691 = vsub.f32 1.0, %v690
  %v692 = vmul.f32 %v689, %v691
  %v693 = vadd.f32 %v689, %v692
  %vm694 = vweird.f32 %v688
  %vm695 = vweird.f32 %v689
  %vm696 = vmor %vm694, %vm695
  %v697 = vsel %vm696, %v689, %v693
  %v698 = vand.u32 2147483647, %v688
  %vm699 = vcmp.eq.f32.partialorder %v698, 8.507059e+37
  %v700 = vand.u32 %v688, 2147483648
  %v701 = vor.u32 1.1754944e-38, %v700
  %v702 = vsel %vm699, %v701, %v697
  %v703 = vmul.f32 1.0, %v702
  %v704 = vadd.f32 %v622, %v662
  %v705 = vxor.u32 %v704, 2147483648
  %v706 = vmul.f32 %v705, 1.442695
  %v707 = vpow.pop %v706
  %v708 = vadd.f32 %v707, 1.0
  %v709 = vrcp.pop %v708
  %v710 = vmul.f32 %v708, %v709
  %v711 = vsub.f32 1.0, %v710
  %v712 = vmul.f32 %v709, %v711
  %v713 = vadd.f32 %v709, %v712
  %vm714 = vweird.f32 %v708
  %vm715 = vweird.f32 %v709
  %vm716 = vmor %vm714, %vm715
  %v717 = vsel %vm716, %v709, %v713
  %v718 = vand.u32 2147483647, %v708
  %vm719 = vcmp.eq.f32.partialorder %v718, 8.507059e+37
  %v720 = vand.u32 %v708, 2147483648
  %v721 = vor.u32 1.1754944e-38, %v720
  %v722 = vsel %vm719, %v721, %v717
  %v723 = vmul.f32 1.0, %v722
  %v724 = vmul.f32 %v703, %v682
  %v725 = vadd.f32 %v623, %v724
  %v726 = vtanh.pop %v725
  %v727 = vsub.f32 1.0, %v723
  %v728 = vmul.f32 %v727, %v726
  %v729 = vmul.f32 %v723, %v619
  %v730 = vadd.f32 %v728, %v729
  %s731 = sadd.s32 %s78, 4
  %v732 = vstv %s731
  %vm733 = vcmp.gt.s32.totalorder %v77, %v732
  %v734 = vsel %vm733, 1, 0
  %v735 = vcvt.s32.f32 %v734
  %737 = vset.pattern.permute.xlu0 0
  %738 = vperm.xlu0 %737, %v735
  %v739 = vpop.permute.xlu0 %738
  %v741 = vmul.f32 %v739, %v730
  %s742 = scalar_lea.vmem %s5, 32
  %743 = vst [vmem:[%s742] sm:$0xff] %v741
  %v744 = vsub.f32 1.0, %v735
  %746 = vset.pattern.permute.xlu0 0
  %747 = vperm.xlu0 %746, %v744
  %v748 = vpop.permute.xlu0 %747
  %v750 = vmul.f32 %v748, %v619
  %v751 = vadd.f32 %v741, %v750
  %752 = vst [vmem:[%s6] sm:$0xff] %v751
  %v753 = vld [vmem:[%s6] sm:$0xff]
  %s754 = scalar_lea.vmem %s4, 120
  %v755 = vld [vmem:[%s754] sm:$0xff]
  %v756 = vld [vmem:[%s754 + $0x8] sm:$0xff]
  %v757 = vld [vmem:[%s754 + $0x10] sm:$0xff]
  %758 = vmatpush.msra.mxu0 %v73
  %759 = vmatpush.msra.mxu0 %v70
  %760 = vmatpush.msra.mxu0 %v67
  %761 = vmatpush.msra.mxu0 %v64
  %762 = vmatpush.msra.mxu0 %v61
  %763 = vmatpush.msra.mxu0 %v58
  %764 = vmatpush.msra.mxu0 %v55
  %765 = vmatpush.msra.mxu0 %v52
  %766 = vmatpush.msra.mxu0 %v49
  %767 = vmatpush.msra.mxu0 %v46
  %768 = vmatpush.msra.mxu0 %v43
  %769 = vmatpush.msra.mxu0 %v40
  %770 = vmatpush.msra.mxu0 %v37
  %771 = vmatpush.msra.mxu0 %v34
  %772 = vmatpush.msra.mxu0 %v31
  %773 = vmatpush.msra.mxu0 %v28
  %774 = vmatmul.f32.gmra.mxu0 %v753
  %v775 = vpop.f32.mrf.mxu0
  %v776 = vadd.f32 %v84, %v775
  %777 = vdwg.mxu0
  %778 = vmatpush.msra.mxu0 %v74
  %779 = vmatpush.msra.mxu0 %v71
  %780 = vmatpush.msra.mxu0 %v68
  %781 = vmatpush.msra.mxu0 %v65
  %782 = vmatpush.msra.mxu0 %v62
  %783 = vmatpush.msra.mxu0 %v59
  %784 = vmatpush.msra.mxu0 %v56
  %785 = vmatpush.msra.mxu0 %v53
  %786 = vmatpush.msra.mxu0 %v50
  %787 = vmatpush.msra.mxu0 %v47
  %788 = vmatpush.msra.mxu0 %v44
  %789 = vmatpush.msra.mxu0 %v41
  %790 = vmatpush.msra.mxu0 %v38
  %791 = vmatpush.msra.mxu0 %v35
  %792 = vmatpush.msra.mxu0 %v32
  %793 = vmatpush.msra.mxu0 %v29
  %794 = vmatmul.f32.gmra.mxu0 %v753
  %v795 = vpop.f32.mrf.mxu0
  %v796 = vadd.f32 %v85, %v795
  %797 = vdwg.mxu0
  %798 = vmatpush.msra.mxu0 %v75
  %799 = vmatpush.msra.mxu0 %v72
  %800 = vmatpush.msra.mxu0 %v69
  %801 = vmatpush.msra.mxu0 %v66
  %802 = vmatpush.msra.mxu0 %v63
  %803 = vmatpush.msra.mxu0 %v60
  %804 = vmatpush.msra.mxu0 %v57
  %805 = vmatpush.msra.mxu0 %v54
  %806 = vmatpush.msra.mxu0 %v51
  %807 = vmatpush.msra.mxu0 %v48
  %808 = vmatpush.msra.mxu0 %v45
  %809 = vmatpush.msra.mxu0 %v42
  %810 = vmatpush.msra.mxu0 %v39
  %811 = vmatpush.msra.mxu0 %v36
  %812 = vmatpush.msra.mxu0 %v33
  %813 = vmatpush.msra.mxu0 %v30
  %814 = vmatmul.f32.gmra.mxu0 %v753
  %v815 = vpop.f32.mrf.mxu0
  %v816 = vadd.f32 %v86, %v815
  %817 = vdwg.mxu0
  %v818 = vadd.f32 %v755, %v776
  %v819 = vxor.u32 %v818, 2147483648
  %v820 = vmul.f32 %v819, 1.442695
  %v821 = vpow.pop %v820
  %v822 = vadd.f32 %v821, 1.0
  %v823 = vrcp.pop %v822
  %v824 = vmul.f32 %v822, %v823
  %v825 = vsub.f32 1.0, %v824
  %v826 = vmul.f32 %v823, %v825
  %v827 = vadd.f32 %v823, %v826
  %vm828 = vweird.f32 %v822
  %vm829 = vweird.f32 %v823
  %vm830 = vmor %vm828, %vm829
  %v831 = vsel %vm830, %v823, %v827
  %v832 = vand.u32 2147483647, %v822
  %vm833 = vcmp.eq.f32.partialorder %v832, 8.507059e+37
  %v834 = vand.u32 %v822, 2147483648
  %v835 = vor.u32 1.1754944e-38, %v834
  %v836 = vsel %vm833, %v835, %v831
  %v837 = vmul.f32 1.0, %v836
  %v838 = vadd.f32 %v756, %v796
  %v839 = vxor.u32 %v838, 2147483648
  %v840 = vmul.f32 %v839, 1.442695
  %v841 = vpow.pop %v840
  %v842 = vadd.f32 %v841, 1.0
  %v843 = vrcp.pop %v842
  %v844 = vmul.f32 %v842, %v843
  %v845 = vsub.f32 1.0, %v844
  %v846 = vmul.f32 %v843, %v845
  %v847 = vadd.f32 %v843, %v846
  %vm848 = vweird.f32 %v842
  %vm849 = vweird.f32 %v843
  %vm850 = vmor %vm848, %vm849
  %v851 = vsel %vm850, %v843, %v847
  %v852 = vand.u32 2147483647, %v842
  %vm853 = vcmp.eq.f32.partialorder %v852, 8.507059e+37
  %v854 = vand.u32 %v842, 2147483648
  %v855 = vor.u32 1.1754944e-38, %v854
  %v856 = vsel %vm853, %v855, %v851
  %v857 = vmul.f32 1.0, %v856
  %v858 = vmul.f32 %v837, %v816
  %v859 = vadd.f32 %v757, %v858
  %v860 = vtanh.pop %v859
  %v861 = vsub.f32 1.0, %v857
  %v862 = vmul.f32 %v861, %v860
  %v863 = vmul.f32 %v857, %v753
  %v864 = vadd.f32 %v862, %v863
  %s865 = sadd.s32 %s78, 5
  %v866 = vstv %s865
  %vm867 = vcmp.gt.s32.totalorder %v77, %v866
  %v868 = vsel %vm867, 1, 0
  %v869 = vcvt.s32.f32 %v868
  %871 = vset.pattern.permute.xlu0 0
  %872 = vperm.xlu0 %871, %v869
  %v873 = vpop.permute.xlu0 %872
  %v875 = vmul.f32 %v873, %v864
  %s876 = scalar_lea.vmem %s5, 40
  %877 = vst [vmem:[%s876] sm:$0xff] %v875
  %v878 = vsub.f32 1.0, %v869
  %880 = vset.pattern.permute.xlu0 0
  %881 = vperm.xlu0 %880, %v878
  %v882 = vpop.permute.xlu0 %881
  %v884 = vmul.f32 %v882, %v753
  %v885 = vadd.f32 %v875, %v884
  %886 = vst [vmem:[%s6] sm:$0xff] %v885
  %v887 = vld [vmem:[%s6] sm:$0xff]
  %s888 = scalar_lea.vmem %s4, 144
  %v889 = vld [vmem:[%s888] sm:$0xff]
  %v890 = vld [vmem:[%s888 + $0x8] sm:$0xff]
  %v891 = vld [vmem:[%s888 + $0x10] sm:$0xff]
  %892 = vmatpush.msra.mxu0 %v73
  %893 = vmatpush.msra.mxu0 %v70
  %894 = vmatpush.msra.mxu0 %v67
  %895 = vmatpush.msra.mxu0 %v64
  %896 = vmatpush.msra.mxu0 %v61
  %897 = vmatpush.msra.mxu0 %v58
  %898 = vmatpush.msra.mxu0 %v55
  %899 = vmatpush.msra.mxu0 %v52
  %900 = vmatpush.msra.mxu0 %v49
  %901 = vmatpush.msra.mxu0 %v46
  %902 = vmatpush.msra.mxu0 %v43
  %903 = vmatpush.msra.mxu0 %v40
  %904 = vmatpush.msra.mxu0 %v37
  %905 = vmatpush.msra.mxu0 %v34
  %906 = vmatpush.msra.mxu0 %v31
  %907 = vmatpush.msra.mxu0 %v28
  %908 = vmatmul.f32.gmra.mxu0 %v887
  %v909 = vpop.f32.mrf.mxu0
  %v910 = vadd.f32 %v84, %v909
  %911 = vdwg.mxu0
  %912 = vmatpush.msra.mxu0 %v74
  %913 = vmatpush.msra.mxu0 %v71
  %914 = vmatpush.msra.mxu0 %v68
  %915 = vmatpush.msra.mxu0 %v65
  %916 = vmatpush.msra.mxu0 %v62
  %917 = vmatpush.msra.mxu0 %v59
  %918 = vmatpush.msra.mxu0 %v56
  %919 = vmatpush.msra.mxu0 %v53
  %920 = vmatpush.msra.mxu0 %v50
  %921 = vmatpush.msra.mxu0 %v47
  %922 = vmatpush.msra.mxu0 %v44
  %923 = vmatpush.msra.mxu0 %v41
  %924 = vmatpush.msra.mxu0 %v38
  %925 = vmatpush.msra.mxu0 %v35
  %926 = vmatpush.msra.mxu0 %v32
  %927 = vmatpush.msra.mxu0 %v29
  %928 = vmatmul.f32.gmra.mxu0 %v887
  %v929 = vpop.f32.mrf.mxu0
  %v930 = vadd.f32 %v85, %v929
  %931 = vdwg.mxu0
  %932 = vmatpush.msra.mxu0 %v75
  %933 = vmatpush.msra.mxu0 %v72
  %934 = vmatpush.msra.mxu0 %v69
  %935 = vmatpush.msra.mxu0 %v66
  %936 = vmatpush.msra.mxu0 %v63
  %937 = vmatpush.msra.mxu0 %v60
  %938 = vmatpush.msra.mxu0 %v57
  %939 = vmatpush.msra.mxu0 %v54
  %940 = vmatpush.msra.mxu0 %v51
  %941 = vmatpush.msra.mxu0 %v48
  %942 = vmatpush.msra.mxu0 %v45
  %943 = vmatpush.msra.mxu0 %v42
  %944 = vmatpush.msra.mxu0 %v39
  %945 = vmatpush.msra.mxu0 %v36
  %946 = vmatpush.msra.mxu0 %v33
  %947 = vmatpush.msra.mxu0 %v30
  %948 = vmatmul.f32.gmra.mxu0 %v887
  %v949 = vpop.f32.mrf.mxu0
  %v950 = vadd.f32 %v86, %v949
  %951 = vdwg.mxu0
  %v952 = vadd.f32 %v889, %v910
  %v953 = vxor.u32 %v952, 2147483648
  %v954 = vmul.f32 %v953, 1.442695
  %v955 = vpow.pop %v954
  %v956 = vadd.f32 %v955, 1.0
  %v957 = vrcp.pop %v956
  %v958 = vmul.f32 %v956, %v957
  %v959 = vsub.f32 1.0, %v958
  %v960 = vmul.f32 %v957, %v959
  %v961 = vadd.f32 %v957, %v960
  %vm962 = vweird.f32 %v956
  %vm963 = vweird.f32 %v957
  %vm964 = vmor %vm962, %vm963
  %v965 = vsel %vm964, %v957, %v961
  %v966 = vand.u32 2147483647, %v956
  %vm967 = vcmp.eq.f32.partialorder %v966, 8.507059e+37
  %v968 = vand.u32 %v956, 2147483648
  %v969 = vor.u32 1.1754944e-38, %v968
  %v970 = vsel %vm967, %v969, %v965
  %v971 = vmul.f32 1.0, %v970
  %v972 = vadd.f32 %v890, %v930
  %v973 = vxor.u32 %v972, 2147483648
  %v974 = vmul.f32 %v973, 1.442695
  %v975 = vpow.pop %v974
  %v976 = vadd.f32 %v975, 1.0
  %v977 = vrcp.pop %v976
  %v978 = vmul.f32 %v976, %v977
  %v979 = vsub.f32 1.0, %v978
  %v980 = vmul.f32 %v977, %v979
  %v981 = vadd.f32 %v977, %v980
  %vm982 = vweird.f32 %v976
  %vm983 = vweird.f32 %v977
  %vm984 = vmor %vm982, %vm983
  %v985 = vsel %vm984, %v977, %v981
  %v986 = vand.u32 2147483647, %v976
  %vm987 = vcmp.eq.f32.partialorder %v986, 8.507059e+37
  %v988 = vand.u32 %v976, 2147483648
  %v989 = vor.u32 1.1754944e-38, %v988
  %v990 = vsel %vm987, %v989, %v985
  %v991 = vmul.f32 1.0, %v990
  %v992 = vmul.f32 %v971, %v950
  %v993 = vadd.f32 %v891, %v992
  %v994 = vtanh.pop %v993
  %v995 = vsub.f32 1.0, %v991
  %v996 = vmul.f32 %v995, %v994
  %v997 = vmul.f32 %v991, %v887
  %v998 = vadd.f32 %v996, %v997
  %s999 = sadd.s32 %s78, 6
  %v1000 = vstv %s999
  %vm1001 = vcmp.gt.s32.totalorder %v77, %v1000
  %v1002 = vsel %vm1001, 1, 0
  %v1003 = vcvt.s32.f32 %v1002
  %1005 = vset.pattern.permute.xlu0 0
  %1006 = vperm.xlu0 %1005, %v1003
  %v1007 = vpop.permute.xlu0 %1006
  %v1009 = vmul.f32 %v1007, %v998
  %s1010 = scalar_lea.vmem %s5, 48
  %1011 = vst [vmem:[%s1010] sm:$0xff] %v1009
  %v1012 = vsub.f32 1.0, %v1003
  %1014 = vset.pattern.permute.xlu0 0
  %1015 = vperm.xlu0 %1014, %v1012
  %v1016 = vpop.permute.xlu0 %1015
  %v1018 = vmul.f32 %v1016, %v887
  %v1019 = vadd.f32 %v1009, %v1018
  %1020 = vst [vmem:[%s6] sm:$0xff] %v1019
  %v1021 = vld [vmem:[%s6] sm:$0xff]
  %s1022 = scalar_lea.vmem %s4, 168
  %v1023 = vld [vmem:[%s1022] sm:$0xff]
  %v1024 = vld [vmem:[%s1022 + $0x8] sm:$0xff]
  %v1025 = vld [vmem:[%s1022 + $0x10] sm:$0xff]
  %1026 = vmatpush.msra.mxu0 %v73
  %1027 = vmatpush.msra.mxu0 %v70
  %1028 = vmatpush.msra.mxu0 %v67
  %1029 = vmatpush.msra.mxu0 %v64
  %1030 = vmatpush.msra.mxu0 %v61
  %1031 = vmatpush.msra.mxu0 %v58
  %1032 = vmatpush.msra.mxu0 %v55
  %1033 = vmatpush.msra.mxu0 %v52
  %1034 = vmatpush.msra.mxu0 %v49
  %1035 = vmatpush.msra.mxu0 %v46
  %1036 = vmatpush.msra.mxu0 %v43
  %1037 = vmatpush.msra.mxu0 %v40
  %1038 = vmatpush.msra.mxu0 %v37
  %1039 = vmatpush.msra.mxu0 %v34
  %1040 = vmatpush.msra.mxu0 %v31
  %1041 = vmatpush.msra.mxu0 %v28
  %1042 = vmatmul.f32.gmra.mxu0 %v1021
  %v1043 = vpop.f32.mrf.mxu0
  %v1044 = vadd.f32 %v84, %v1043
  %1045 = vdwg.mxu0
  %1046 = vmatpush.msra.mxu0 %v74
  %1047 = vmatpush.msra.mxu0 %v71
  %1048 = vmatpush.msra.mxu0 %v68
  %1049 = vmatpush.msra.mxu0 %v65
  %1050 = vmatpush.msra.mxu0 %v62
  %1051 = vmatpush.msra.mxu0 %v59
  %1052 = vmatpush.msra.mxu0 %v56
  %1053 = vmatpush.msra.mxu0 %v53
  %1054 = vmatpush.msra.mxu0 %v50
  %1055 = vmatpush.msra.mxu0 %v47
  %1056 = vmatpush.msra.mxu0 %v44
  %1057 = vmatpush.msra.mxu0 %v41
  %1058 = vmatpush.msra.mxu0 %v38
  %1059 = vmatpush.msra.mxu0 %v35
  %1060 = vmatpush.msra.mxu0 %v32
  %1061 = vmatpush.msra.mxu0 %v29
  %1062 = vmatmul.f32.gmra.mxu0 %v1021
  %v1063 = vpop.f32.mrf.mxu0
  %v1064 = vadd.f32 %v85, %v1063
  %1065 = vdwg.mxu0
  %1066 = vmatpush.msra.mxu0 %v75
  %1067 = vmatpush.msra.mxu0 %v72
  %1068 = vmatpush.msra.mxu0 %v69
  %1069 = vmatpush.msra.mxu0 %v66
  %1070 = vmatpush.msra.mxu0 %v63
  %1071 = vmatpush.msra.mxu0 %v60
  %1072 = vmatpush.msra.mxu0 %v57
  %1073 = vmatpush.msra.mxu0 %v54
  %1074 = vmatpush.msra.mxu0 %v51
  %1075 = vmatpush.msra.mxu0 %v48
  %1076 = vmatpush.msra.mxu0 %v45
  %1077 = vmatpush.msra.mxu0 %v42
  %1078 = vmatpush.msra.mxu0 %v39
  %1079 = vmatpush.msra.mxu0 %v36
  %1080 = vmatpush.msra.mxu0 %v33
  %1081 = vmatpush.msra.mxu0 %v30
  %1082 = vmatmul.f32.gmra.mxu0 %v1021
  %v1083 = vpop.f32.mrf.mxu0
  %v1084 = vadd.f32 %v86, %v1083
  %1085 = vdwg.mxu0
  %v1086 = vadd.f32 %v1023, %v1044
  %v1087 = vxor.u32 %v1086, 2147483648
  %v1088 = vmul.f32 %v1087, 1.442695
  %v1089 = vpow.pop %v1088
  %v1090 = vadd.f32 %v1089, 1.0
  %v1091 = vrcp.pop %v1090
  %v1092 = vmul.f32 %v1090, %v1091
  %v1093 = vsub.f32 1.0, %v1092
  %v1094 = vmul.f32 %v1091, %v1093
  %v1095 = vadd.f32 %v1091, %v1094
  %vm1096 = vweird.f32 %v1090
  %vm1097 = vweird.f32 %v1091
  %vm1098 = vmor %vm1096, %vm1097
  %v1099 = vsel %vm1098, %v1091, %v1095
  %v1100 = vand.u32 2147483647, %v1090
  %vm1101 = vcmp.eq.f32.partialorder %v1100, 8.507059e+37
  %v1102 = vand.u32 %v1090, 2147483648
  %v1103 = vor.u32 1.1754944e-38, %v1102
  %v1104 = vsel %vm1101, %v1103, %v1099
  %v1105 = vmul.f32 1.0, %v1104
  %v1106 = vadd.f32 %v1024, %v1064
  %v1107 = vxor.u32 %v1106, 2147483648
  %v1108 = vmul.f32 %v1107, 1.442695
  %v1109 = vpow.pop %v1108
  %v1110 = vadd.f32 %v1109, 1.0
  %v1111 = vrcp.pop %v1110
  %v1112 = vmul.f32 %v1110, %v1111
  %v1113 = vsub.f32 1.0, %v1112
  %v1114 = vmul.f32 %v1111, %v1113
  %v1115 = vadd.f32 %v1111, %v1114
  %vm1116 = vweird.f32 %v1110
  %vm1117 = vweird.f32 %v1111
  %vm1118 = vmor %vm1116, %vm1117
  %v1119 = vsel %vm1118, %v1111, %v1115
  %v1120 = vand.u32 2147483647, %v1110
  %vm1121 = vcmp.eq.f32.partialorder %v1120, 8.507059e+37
  %v1122 = vand.u32 %v1110, 2147483648
  %v1123 = vor.u32 1.1754944e-38, %v1122
  %v1124 = vsel %vm1121, %v1123, %v1119
  %v1125 = vmul.f32 1.0, %v1124
  %v1126 = vmul.f32 %v1105, %v1084
  %v1127 = vadd.f32 %v1025, %v1126
  %v1128 = vtanh.pop %v1127
  %v1129 = vsub.f32 1.0, %v1125
  %v1130 = vmul.f32 %v1129, %v1128
  %v1131 = vmul.f32 %v1125, %v1021
  %v1132 = vadd.f32 %v1130, %v1131
  %s1133 = sadd.s32 %s78, 7
  %v1134 = vstv %s1133
  %vm1135 = vcmp.gt.s32.totalorder %v77, %v1134
  %v1136 = vsel %vm1135, 1, 0
  %v1137 = vcvt.s32.f32 %v1136
  %1139 = vset.pattern.permute.xlu0 0
  %1140 = vperm.xlu0 %1139, %v1137
  %v1141 = vpop.permute.xlu0 %1140
  %v1143 = vmul.f32 %v1141, %v1132
  %s1144 = scalar_lea.vmem %s5, 56
  %1145 = vst [vmem:[%s1144] sm:$0xff] %v1143
  %v1146 = vsub.f32 1.0, %v1137
  %1148 = vset.pattern.permute.xlu0 0
  %1149 = vperm.xlu0 %1148, %v1146
  %v1150 = vpop.permute.xlu0 %1149
  %v1152 = vmul.f32 %v1150, %v1021
  %v1153 = vadd.f32 %v1143, %v1152
  %1154 = vst [vmem:[%s6] sm:$0xff] %v1153
  // Predicated region
  $region26: #{super_awesome_forward.1} parent=0 // pred_check
    _
  $region27: #{super_awesome_forward.1} parent=0 // pred_check_branch
    %1156 = sbr.rel (0) target = $region29
  $region28: #{super_awesome_forward.1} parent=0 // pred_region
    _
  $region29: #{super_awesome_forward.1} parent=0 // pred_fallthru
    _
  // Predicated region
  $region30: #{super_awesome_forward.1} parent=0 // pred_check
    _
  $region31: #{super_awesome_forward.1} parent=0 // pred_check_branch
    %1158 = sbr.rel (0) target = $region33
  $region32: #{super_awesome_forward.1} parent=0 // pred_region
    _
  $region33: #{super_awesome_forward.1} parent=0 // pred_fallthru
    _
  // Predicated region
  $region34: #{super_awesome_forward.1} parent=0 // pred_check
    _
  $region35: #{super_awesome_forward.1} parent=0 // pred_check_branch
    %1160 = sbr.rel (0) target = $region37
  $region36: #{super_awesome_forward.1} parent=0 // pred_region
    _
  $region37: #{super_awesome_forward.1} parent=0 // pred_fallthru
    _
  // Predicated region
  $region38: #{super_awesome_forward.1} parent=0 // pred_check
    _
  $region39: #{super_awesome_forward.1} parent=0 // pred_check_branch
    %1162 = sbr.rel (0) target = $region41
  $region40: #{super_awesome_forward.1} parent=0 // pred_region
    _
  $region41: #{super_awesome_forward.1} parent=0 // pred_fallthru
    _

</llo_original>
